<compile_context>
chip_gen: v7x
topology: tpu7x:2x2x1
jax: 0.10.0
libtpu: 0.0.40
codegen_flags: <defaults>
</compile_context>

<pallas_src>
import jax
import jax.numpy as jnp
import numpy as np
from jax.experimental import pallas as pl
from jax.experimental.pallas import tpu as pltpu

# ----------------------------- config ("args") -------------------------------
NUM_FEATURES = 4
CONV1_OUT = 8
CONV2_OUT = 8
CONV3_OUT = 4
FC1_OUT = 64
H_IN, W_IN = 50, 8                    # implied by LayerNorm(conv3_out * 17 * 5)
H1, H2, HP, H3 = 46, 42, 21, 17       # heights after conv1 / conv2 / pool / conv3
W1O, W2O, W3O = 8, 6, 5               # widths  after conv1 / conv2(+pool) / conv3
HALF1, HALF2 = 23, 21                 # rows per parity plane after conv1 / conv2
C0 = W_IN * NUM_FEATURES              # 32  packed input row width  (w*Cin + ci)
C1 = W1O * CONV1_OUT                  # 64  packed conv1 row width
C2 = W2O * CONV2_OUT                  # 48  packed conv2 row width
C3 = W3O * CONV3_OUT                  # 20  packed conv3 row width
FLAT = CONV3_OUT * H3 * W3O           # 340 LayerNorm / fc1 input size
BATCH = 2
NEG_SLOPE = 0.01                      # F.leaky_relu default
LN_EPS = 1e-5                         # nn.LayerNorm default
OUT_LANES = 128                       # lane-dense output padding for fc4
FBIAS = FC1_OUT + 32 + 16 + OUT_LANES  # 240 packed fc-bias width

_PP_ORDER = ("w1cat", "w2cat", "w3cat", "cbias", "lnp",
             "wf1", "wf2", "wf3", "wf4p", "fbias")


# ------------------------------- fused kernel --------------------------------
def _critic_kernel(x_ref, act_ref,
                   w1_ref, w2_ref, w3_ref, cb_ref, ln_ref,
                   wf1_ref, wf2_ref, wf3_ref, wf4_ref, fb_ref,
                   o_ref):
    """Single grid step: the whole batch, all layers, everything in VMEM/vregs."""
    f32 = jnp.float32
    B = BATCH

    def lrelu(v):                      # 2 VPU ops (mul+max) instead of cmp+mul+sel
        return jnp.maximum(v, NEG_SLOPE * v)

    def dot(a, b):
        return jnp.dot(a, b, preferred_element_type=f32)

    def hcat(*xs):                     # K / lane concatenation
        return jnp.concatenate(xs, axis=1)

    def vcat(*xs):                     # M / sublane concatenation
        return jnp.concatenate(xs, axis=0)

    # Parity planes of the input, rows interleaved (m, b): (25*B, 32) each,
    # packed column layout col = w*Cin + ci.
    xe = x_ref[0]
    xo = x_ref[1]

    # ---------------- conv1 (5,1) + leaky_relu : ONE matmul ------------------
    # Shifted row-window slices hoisted once, reused by both parity planes.
    n1 = HALF1 * B                                               # 46
    xe0, xo0 = xe[0:n1], xo[0:n1]
    xe1, xo1 = xe[B:n1 + B], xo[B:n1 + B]
    xe2, xo2 = xe[2 * B:n1 + 2 * B], xo[2 * B:n1 + 2 * B]
    # K-concatenated taps (kernel rows 0..4); even outputs stacked above odd.
    lhs1 = vcat(hcat(xe0, xo0, xe1, xo1, xe2),
                hcat(xo0, xe1, xo1, xe2, xo2))                   # (92, 160)
    a1 = lrelu(dot(lhs1, w1_ref[...]) + cb_ref[:, 0:C1])         # (92, 64)
    a1e, a1o = a1[0:n1], a1[n1:2 * n1]

    # ---------------- conv2 (5,3) + leaky_relu : ONE matmul ------------------
    n2 = HALF2 * B                                               # 42
    e0, o0 = a1e[0:n2], a1o[0:n2]
    e1, o1 = a1e[B:n2 + B], a1o[B:n2 + B]
    e2, o2 = a1e[2 * B:n2 + 2 * B], a1o[2 * B:n2 + 2 * B]
    lhs2 = vcat(hcat(e0, o0, e1, o1, e2),
                hcat(o0, e1, o1, e2, o2))                        # (84, 320)
    a2 = dot(lhs2, w2_ref[...]) + cb_ref[:, C1:C1 + C2]          # (84, 48)

    # ---------------- max_pool2d (2,1): parity planes -> free elementwise max
    pooled = jnp.maximum(lrelu(a2[0:n2]), lrelu(a2[n2:2 * n2]))  # (42, 48)

    # ---------------- conv3 (5,2), no activation : ONE matmul ----------------
    n3 = H3 * B                                                  # 34
    lhs3 = hcat(pooled[0:n3], pooled[B:n3 + B], pooled[2 * B:n3 + 2 * B],
                pooled[3 * B:n3 + 3 * B], pooled[4 * B:n3 + 4 * B])   # (34, 240)
    a3 = dot(lhs3, w3_ref[...]) + cb_ref[:, C1 + C2:C1 + C2 + C3]     # (34, 20)

    # ---- flatten bridge: (h3, b)-interleaved rows -> (B, 340) batch-on-M ----
    y = hcat(*[a3[h * B:(h + 1) * B] for h in range(H3)])        # (2, 340)

    # ---------------- LayerNorm(340) (gamma/beta pre-permuted) ---------------
    mu = jnp.sum(y, axis=1, keepdims=True) * (1.0 / FLAT)
    yc = y - mu
    var = jnp.sum(yc * yc, axis=1, keepdims=True) * (1.0 / FLAT)
    y = yc * jax.lax.rsqrt(var + LN_EPS) * ln_ref[0:1, :] + ln_ref[1:2, :]

    # ---------------- fc1..fc4: batched (B, .) x (., .) matmuls --------------
    h = jnp.maximum(dot(y, wf1_ref[...]) + fb_ref[:, 0:FC1_OUT], 0.0)     # (2,64)
    h = lrelu(dot(h, wf2_ref[...]) + fb_ref[:, FC1_OUT:FC1_OUT + 32])     # (2,32)
    h = lrelu(dot(hcat(h, act_ref[:, 0:8]), wf3_ref[...])
              + fb_ref[:, FC1_OUT + 32:FC1_OUT + 48])                     # (2,16)
    q = (dot(hcat(h, act_ref[:, 8:16]), wf4_ref[...])
         + fb_ref[:, FC1_OUT + 48:FBIAS])                                 # (2,128)
    o_ref[...] = q                                              # lane-dense store


# ----------------------------- parameter packing -----------------------------
def prepare_params(p):
    """One-time (outside the jitted forward) re-layout of the torch parameters."""
    f32 = jnp.float32
    w1t = jnp.transpose(p["w1c"], (2, 3, 1, 0)).astype(f32)   # (5,1,4,8) [kh,kw,ci,co]
    w2t = jnp.transpose(p["w2c"], (2, 3, 1, 0)).astype(f32)   # (5,3,8,8)
    w3t = jnp.transpose(p["w3c"], (2, 3, 1, 0)).astype(f32)   # (5,2,8,4)

    # Per kernel-row packed (W*Cin, W*Cout) matrices; K-concatenate the 5 rows.
    w1cat = jnp.concatenate(
        [jnp.kron(jnp.eye(W_IN, dtype=f32), w1t[i, 0]) for i in range(5)],
        axis=0)                                                          # (160, 64)
    w2cat = jnp.concatenate(
        [sum(jnp.kron(jnp.eye(W1O, W2O, k=-j, dtype=f32), w2t[i, j]) for j in range(3))
         for i in range(5)], axis=0)                                     # (320, 48)
    w3cat = jnp.concatenate(
        [sum(jnp.kron(jnp.eye(W2O, W3O, k=-j, dtype=f32), w3t[i, j]) for j in range(2))
         for i in range(5)], axis=0)                                     # (240, 20)

    # All conv biases in one lane-dense row (col = w*Cout + co per layer).
    cbias = jnp.concatenate([jnp.tile(p["b1c"], W1O), jnp.tile(p["b2c"], W2O),
                             jnp.tile(p["b3c"], W3O)]).reshape(1, C1 + C2 + C3)

    def perm(v):  # torch channel-major flatten order -> kernel (h, w, c) order
        return v.reshape(CONV3_OUT, H3, W3O).transpose(1, 2, 0).reshape(FLAT)

    lnp = jnp.stack([perm(p["ln_g"]), perm(p["ln_b"])], axis=0)          # (2, 340)
    wf1 = (p["w_fc1"].reshape(CONV3_OUT, H3, W3O, FC1_OUT)
           .transpose(1, 2, 0, 3).reshape(FLAT, FC1_OUT))                # (340, 64)

    fbias = jnp.concatenate(
        [p["b_fc1"], p["b_fc2"], p["b_fc3"],
         jnp.pad(p["b_fc4"], (0, OUT_LANES - 1))]).reshape(1, FBIAS)     # (1, 240)

    return {
        "w1cat": w1cat, "w2cat": w2cat, "w3cat": w3cat, "cbias": cbias,
        "lnp": lnp, "wf1": wf1, "wf2": p["w_fc2"], "wf3": p["w_fc3"],
        "wf4p": jnp.pad(p["w_fc4"], ((0, 0), (0, OUT_LANES - 1))),       # (24, 128)
        "fbias": fbias,
    }
    # TODO(synk): optimizer / .to(device) / checkpoint I/O are training-side and
    # have no forward-pass (kernel) equivalent; intentionally not ported.


def _full_spec(shape):
    """Whole-array VMEM block, independent of the (size-1) grid index."""
    nd = len(shape)
    return pl.BlockSpec(shape, lambda i, _nd=nd: (0,) * _nd)


# ------------------------------- full forward --------------------------------
@jax.jit
def critic_forward_pallas(state_value_nchw, action_1, action, pp):
    b = state_value_nchw.shape[0]
    f32 = jnp.float32
    # Input prep (tiny, fused by XLA): NCHW -> NHWC rows packed as col = w*Cin+ci,
    # parity-split the H rows and interleave batch on sublanes:
    # xpk[parity, m*B + b, :] = row 2m+parity of batch element b.
    x = jnp.transpose(state_value_nchw, (0, 2, 3, 1)).astype(f32)     # (B,50,8,4)
    x = x.reshape(b, H_IN // 2, 2, C0)                                # (B,25,2,32)
    xpk = jnp.transpose(x, (2, 1, 0, 3)).reshape(2, (H_IN // 2) * b, C0)
    acts = jnp.concatenate([action_1, action], axis=1).astype(f32)    # (B, 16)

    in_specs = [
        _full_spec((2, (H_IN // 2) * b, C0)),
        _full_spec((b, 16)),
    ] + [_full_spec(tuple(pp[k].shape)) for k in _PP_ORDER]

    m1, m2, m3 = 2 * HALF1 * b, 2 * HALF2 * b, H3 * b
    flops = 2 * (m1 * (5 * C0) * C1 + m2 * (5 * C1) * C2 + m3 * (5 * C2) * C3
                 + b * (FLAT * FC1_OUT + FC1_OUT * 32 + 40 * 16 + 24 * OUT_LANES))
    bytes_accessed = 4 * (xpk.size + acts.size + b * OUT_LANES
                          + sum(int(pp[k].size) for k in _PP_ORDER))

    out = pl.pallas_call(
        _critic_kernel,
        out_shape=jax.ShapeDtypeStruct((b, OUT_LANES), jnp.float32),
        grid=(1,),                     # whole batch fused into one grid step
        in_specs=in_specs,
        out_specs=pl.BlockSpec((b, OUT_LANES), lambda i: (0, 0)),
        compiler_params=pltpu.CompilerParams(dimension_semantics=("arbitrary",)),
        cost_estimate=pl.CostEstimate(flops=flops, transcendentals=2 * b,
                                      bytes_accessed=bytes_accessed),
    )(xpk, acts, *[pp[k] for k in _PP_ORDER])

    return out[:, 0]                                             # .squeeze()


# ------------------------------ pure-JAX reference ----------------------------
def reference_forward(state_value_nchw, action_1, action, p):
    x = jnp.transpose(state_value_nchw, (0, 2, 3, 1)).astype(jnp.float32)

    def conv(v, w_torch, b):
        wf = jnp.transpose(w_torch, (2, 3, 1, 0))  # HWIO
        y = jax.lax.conv_general_dilated(
            v, wf, (1, 1), "VALID", dimension_numbers=("NHWC", "HWIO", "NHWC"))
        return y + b

    def lrelu(v):
        return jnp.where(v > 0, v, NEG_SLOPE * v)

    h = lrelu(conv(x, p["w1c"], p["b1c"]))
    h = lrelu(conv(h, p["w2c"], p["b2c"]))
    n, hh, ww, c = h.shape
    h = jnp.max(h.reshape(n, hh // 2, 2, ww, c), axis=2)
    h = conv(h, p["w3c"], p["b3c"])
    h = jnp.transpose(h, (0, 3, 1, 2)).reshape(n, FLAT)
    mu = jnp.mean(h, -1, keepdims=True)
    var = jnp.mean((h - mu) ** 2, -1, keepdims=True)
    h = (h - mu) / jnp.sqrt(var + LN_EPS) * p["ln_g"] + p["ln_b"]
    h = jnp.maximum(h @ p["w_fc1"] + p["b_fc1"], 0.0)
    h = lrelu(h @ p["w_fc2"] + p["b_fc2"])
    h = jnp.concatenate([h, action_1], axis=-1)
    h = lrelu(h @ p["w_fc3"] + p["b_fc3"])
    h = jnp.concatenate([h, action], axis=-1)
    h = h @ p["w_fc4"] + p["b_fc4"]
    return jnp.squeeze(h)


# --------------------------------- params init --------------------------------
def init_params(key):
    ks = jax.random.split(key, 12)

    def rnd(k, shape, scale=0.05):
        return (scale * jax.random.normal(k, shape)).astype(jnp.float32)

    return {
        # conv weights kept in PyTorch layout (Cout, Cin, kh, kw)
        "w1c": rnd(ks[0], (CONV1_OUT, NUM_FEATURES, 5, 1)),
        "b1c": rnd(ks[1], (CONV1_OUT,), 0.01),
        "w2c": rnd(ks[2], (CONV2_OUT, CONV1_OUT, 5, 3)),
        "b2c": rnd(ks[3], (CONV2_OUT,), 0.01),
        "w3c": rnd(ks[4], (CONV3_OUT, CONV2_OUT, 5, 2)),
        "b3c": rnd(ks[5], (CONV3_OUT,), 0.01),
        # LayerNorm default init
        "ln_g": jnp.ones((FLAT,), jnp.float32),
        "ln_b": jnp.zeros((FLAT,), jnp.float32),
        # fc weights stored as (in, out)
        "w_fc1": rnd(ks[6], (FLAT, FC1_OUT)),
        "b_fc1": rnd(ks[7], (FC1_OUT,), 0.01),
        "w_fc2": rnd(ks[8], (FC1_OUT, 32)),
        "b_fc2": rnd(ks[9], (32,), 0.01),
        "w_fc3": rnd(ks[10], (40, 16)),
        "b_fc3": jnp.zeros((16,), jnp.float32),
        "w_fc4": rnd(ks[11], (24, 1)),
        "b_fc4": jnp.zeros((1,), jnp.float32),
    }


# ------------------------------------ main ------------------------------------
if __name__ == "__main__":
    key = jax.random.PRNGKey(0)
    k_sv, k_a1, k_a, k_p = jax.random.split(key, 4)

    # state = (state_value NCHW, action_1); action passed separately — as in forward().
    state_value = jax.random.normal(k_sv, (BATCH, NUM_FEATURES, H_IN, W_IN),
                                    dtype=jnp.float32)
    action_1 = jax.random.normal(k_a1, (BATCH, 8), dtype=jnp.float32)  # 32+8 -> fc3(40)
    action = jax.random.normal(k_a, (BATCH, 8), dtype=jnp.float32)     # 16+8 -> fc4(24)
    params = init_params(k_p)

    # One-time weight packing, outside the jitted forward.
    prepared = prepare_params(params)

    out = critic_forward_pallas(state_value, action_1, action, prepared)
    out = jax.block_until_ready(out)

    ref = jax.block_until_ready(
        reference_forward(state_value, action_1, action, params))

    assert out.shape == (BATCH,), out.shape
    np.testing.assert_allclose(np.asarray(out), np.asarray(ref),
                               rtol=5e-3, atol=5e-3)
    print("KERNEL_OK")
</pallas_src>

<mosaic_0001>
module attributes {stable_mosaic.version = 11 : i64} {
  func.func @_critic_kernel(%arg0: i32, %arg1: memref<2x50x32xf32, #tpu.memory_space<vmem>>, %arg2: memref<2x16xf32, #tpu.memory_space<vmem>>, %arg3: memref<160x64xf32, #tpu.memory_space<vmem>>, %arg4: memref<320x48xf32, #tpu.memory_space<vmem>>, %arg5: memref<240x20xf32, #tpu.memory_space<vmem>>, %arg6: memref<1x132xf32, #tpu.memory_space<vmem>>, %arg7: memref<2x340xf32, #tpu.memory_space<vmem>>, %arg8: memref<340x64xf32, #tpu.memory_space<vmem>>, %arg9: memref<64x32xf32, #tpu.memory_space<vmem>>, %arg10: memref<40x16xf32, #tpu.memory_space<vmem>>, %arg11: memref<24x128xf32, #tpu.memory_space<vmem>>, %arg12: memref<1x240xf32, #tpu.memory_space<vmem>>, %arg13: memref<2x128xf32, #tpu.memory_space<vmem>>) attributes {dimension_semantics = [#tpu.dimension_semantics<arbitrary>], iteration_bounds = array<i64: 1>, scalar_prefetch = 0 : i64, scratch_operands = 0 : i64, tpu.core_type = #tpu.core_type<tc>, window_params = [{pipeline_mode = #tpu.pipeline_mode<synchronous>, transform_indices = @transform_0, window_bounds = array<i64: 2, 50, 32>}, {pipeline_mode = #tpu.pipeline_mode<synchronous>, transform_indices = @transform_1, window_bounds = array<i64: 2, 16>}, {pipeline_mode = #tpu.pipeline_mode<synchronous>, transform_indices = @transform_2, window_bounds = array<i64: 160, 64>}, {pipeline_mode = #tpu.pipeline_mode<synchronous>, transform_indices = @transform_3, window_bounds = array<i64: 320, 48>}, {pipeline_mode = #tpu.pipeline_mode<synchronous>, transform_indices = @transform_4, window_bounds = array<i64: 240, 20>}, {pipeline_mode = #tpu.pipeline_mode<synchronous>, transform_indices = @transform_5, window_bounds = array<i64: 1, 132>}, {pipeline_mode = #tpu.pipeline_mode<synchronous>, transform_indices = @transform_6, window_bounds = array<i64: 2, 340>}, {pipeline_mode = #tpu.pipeline_mode<synchronous>, transform_indices = @transform_7, window_bounds = array<i64: 340, 64>}, {pipeline_mode = #tpu.pipeline_mode<synchronous>, transform_indices = @transform_8, window_bounds = array<i64: 64, 32>}, {pipeline_mode = #tpu.pipeline_mode<synchronous>, transform_indices = @transform_9, window_bounds = array<i64: 40, 16>}, {pipeline_mode = #tpu.pipeline_mode<synchronous>, transform_indices = @transform_10, window_bounds = array<i64: 24, 128>}, {pipeline_mode = #tpu.pipeline_mode<synchronous>, transform_indices = @transform_11, window_bounds = array<i64: 1, 240>}, {pipeline_mode = #tpu.pipeline_mode<synchronous>, transform_indices = @transform_12, window_bounds = array<i64: 2, 128>}]} {
    %c0 = arith.constant 0 : index
    %c0_0 = arith.constant 0 : index
    %c0_1 = arith.constant 0 : index
    %0 = vector.load %arg1[%c0, %c0_0, %c0_1] : memref<2x50x32xf32, #tpu.memory_space<vmem>>, vector<1x50x32xf32>
    %1 = vector.shape_cast %0 : vector<1x50x32xf32> to vector<50x32xf32>
    %c1 = arith.constant 1 : index
    %c0_2 = arith.constant 0 : index
    %c0_3 = arith.constant 0 : index
    %2 = vector.load %arg1[%c1, %c0_2, %c0_3] : memref<2x50x32xf32, #tpu.memory_space<vmem>>, vector<1x50x32xf32>
    %3 = vector.shape_cast %2 : vector<1x50x32xf32> to vector<50x32xf32>
    %4 = vector.extract_strided_slice %1 {offsets = [0, 0], sizes = [46, 32], strides = [1, 1]} : vector<50x32xf32> to vector<46x32xf32>
    %5 = vector.extract_strided_slice %3 {offsets = [0, 0], sizes = [46, 32], strides = [1, 1]} : vector<50x32xf32> to vector<46x32xf32>
    %6 = vector.extract_strided_slice %1 {offsets = [2, 0], sizes = [46, 32], strides = [1, 1]} : vector<50x32xf32> to vector<46x32xf32>
    %7 = vector.extract_strided_slice %3 {offsets = [2, 0], sizes = [46, 32], strides = [1, 1]} : vector<50x32xf32> to vector<46x32xf32>
    %8 = vector.extract_strided_slice %1 {offsets = [4, 0], sizes = [46, 32], strides = [1, 1]} : vector<50x32xf32> to vector<46x32xf32>
    %9 = vector.extract_strided_slice %3 {offsets = [4, 0], sizes = [46, 32], strides = [1, 1]} : vector<50x32xf32> to vector<46x32xf32>
    %10 = tpu.concatenate %4, %5, %6, %7, %8 in 1 : vector<46x32xf32>, vector<46x32xf32>, vector<46x32xf32>, vector<46x32xf32>, vector<46x32xf32> -> vector<46x160xf32>
    %11 = tpu.concatenate %5, %6, %7, %8, %9 in 1 : vector<46x32xf32>, vector<46x32xf32>, vector<46x32xf32>, vector<46x32xf32>, vector<46x32xf32> -> vector<46x160xf32>
    %12 = tpu.concatenate %10, %11 in 0 : vector<46x160xf32>, vector<46x160xf32> -> vector<92x160xf32>
    %c0_4 = arith.constant 0 : index
    %c0_5 = arith.constant 0 : index
    %13 = vector.load %arg3[%c0_4, %c0_5] : memref<160x64xf32, #tpu.memory_space<vmem>>, vector<160x64xf32>
    %cst = arith.constant dense<0.000000e+00> : vector<92x64xf32>
    %14 = tpu.matmul %12, %13, %cst {dimension_numbers = #tpu.dot_dimension_numbers<[1], [0], [0], [1], [0, 0, 1, 1], [], []>} : vector<92x160xf32>, vector<160x64xf32>, vector<92x64xf32> -> vector<92x64xf32>
    %c0_6 = arith.constant 0 : index
    %c0_7 = arith.constant 0 : index
    %15 = vector.load %arg6[%c0_6, %c0_7] : memref<1x132xf32, #tpu.memory_space<vmem>>, vector<1x64xf32>
    %16 = vector.broadcast %15 : vector<1x64xf32> to vector<92x64xf32>
    %17 = arith.addf %14, %16 : vector<92x64xf32>
    %cst_8 = arith.constant 0.00999999977 : f32
    %18 = vector.broadcast %cst_8 : f32 to vector<92x64xf32>
    %19 = arith.mulf %18, %17 : vector<92x64xf32>
    %20 = arith.maximumf %17, %19 : vector<92x64xf32>
    %21 = vector.extract_strided_slice %20 {offsets = [0, 0], sizes = [46, 64], strides = [1, 1]} : vector<92x64xf32> to vector<46x64xf32>
    %22 = vector.extract_strided_slice %20 {offsets = [46, 0], sizes = [46, 64], strides = [1, 1]} : vector<92x64xf32> to vector<46x64xf32>
    %23 = vector.extract_strided_slice %21 {offsets = [0, 0], sizes = [42, 64], strides = [1, 1]} : vector<46x64xf32> to vector<42x64xf32>
    %24 = vector.extract_strided_slice %22 {offsets = [0, 0], sizes = [42, 64], strides = [1, 1]} : vector<46x64xf32> to vector<42x64xf32>
    %25 = vector.extract_strided_slice %21 {offsets = [2, 0], sizes = [42, 64], strides = [1, 1]} : vector<46x64xf32> to vector<42x64xf32>
    %26 = vector.extract_strided_slice %22 {offsets = [2, 0], sizes = [42, 64], strides = [1, 1]} : vector<46x64xf32> to vector<42x64xf32>
    %27 = vector.extract_strided_slice %21 {offsets = [4, 0], sizes = [42, 64], strides = [1, 1]} : vector<46x64xf32> to vector<42x64xf32>
    %28 = vector.extract_strided_slice %22 {offsets = [4, 0], sizes = [42, 64], strides = [1, 1]} : vector<46x64xf32> to vector<42x64xf32>
    %29 = tpu.concatenate %23, %24, %25, %26, %27 in 1 : vector<42x64xf32>, vector<42x64xf32>, vector<42x64xf32>, vector<42x64xf32>, vector<42x64xf32> -> vector<42x320xf32>
    %30 = tpu.concatenate %24, %25, %26, %27, %28 in 1 : vector<42x64xf32>, vector<42x64xf32>, vector<42x64xf32>, vector<42x64xf32>, vector<42x64xf32> -> vector<42x320xf32>
    %31 = tpu.concatenate %29, %30 in 0 : vector<42x320xf32>, vector<42x320xf32> -> vector<84x320xf32>
    %c0_9 = arith.constant 0 : index
    %c0_10 = arith.constant 0 : index
    %32 = vector.load %arg4[%c0_9, %c0_10] : memref<320x48xf32, #tpu.memory_space<vmem>>, vector<320x48xf32>
    %cst_11 = arith.constant dense<0.000000e+00> : vector<84x48xf32>
    %33 = tpu.matmul %31, %32, %cst_11 {dimension_numbers = #tpu.dot_dimension_numbers<[1], [0], [0], [1], [0, 0, 1, 1], [], []>} : vector<84x320xf32>, vector<320x48xf32>, vector<84x48xf32> -> vector<84x48xf32>
    %c0_12 = arith.constant 0 : index
    %c64 = arith.constant 64 : index
    %34 = vector.load %arg6[%c0_12, %c64] : memref<1x132xf32, #tpu.memory_space<vmem>>, vector<1x48xf32>
    %35 = vector.broadcast %34 : vector<1x48xf32> to vector<84x48xf32>
    %36 = arith.addf %33, %35 : vector<84x48xf32>
    %37 = vector.extract_strided_slice %36 {offsets = [0, 0], sizes = [42, 48], strides = [1, 1]} : vector<84x48xf32> to vector<42x48xf32>
    %cst_13 = arith.constant 0.00999999977 : f32
    %38 = vector.broadcast %cst_13 : f32 to vector<42x48xf32>
    %39 = arith.mulf %38, %37 : vector<42x48xf32>
    %40 = arith.maximumf %37, %39 : vector<42x48xf32>
    %41 = vector.extract_strided_slice %36 {offsets = [42, 0], sizes = [42, 48], strides = [1, 1]} : vector<84x48xf32> to vector<42x48xf32>
    %cst_14 = arith.constant 0.00999999977 : f32
    %42 = vector.broadcast %cst_14 : f32 to vector<42x48xf32>
    %43 = arith.mulf %42, %41 : vector<42x48xf32>
    %44 = arith.maximumf %41, %43 : vector<42x48xf32>
    %45 = arith.maximumf %40, %44 : vector<42x48xf32>
    %46 = vector.extract_strided_slice %45 {offsets = [0, 0], sizes = [34, 48], strides = [1, 1]} : vector<42x48xf32> to vector<34x48xf32>
    %47 = vector.extract_strided_slice %45 {offsets = [2, 0], sizes = [34, 48], strides = [1, 1]} : vector<42x48xf32> to vector<34x48xf32>
    %48 = vector.extract_strided_slice %45 {offsets = [4, 0], sizes = [34, 48], strides = [1, 1]} : vector<42x48xf32> to vector<34x48xf32>
    %49 = vector.extract_strided_slice %45 {offsets = [6, 0], sizes = [34, 48], strides = [1, 1]} : vector<42x48xf32> to vector<34x48xf32>
    %50 = vector.extract_strided_slice %45 {offsets = [8, 0], sizes = [34, 48], strides = [1, 1]} : vector<42x48xf32> to vector<34x48xf32>
    %51 = tpu.concatenate %46, %47, %48, %49, %50 in 1 : vector<34x48xf32>, vector<34x48xf32>, vector<34x48xf32>, vector<34x48xf32>, vector<34x48xf32> -> vector<34x240xf32>
    %c0_15 = arith.constant 0 : index
    %c0_16 = arith.constant 0 : index
    %52 = vector.load %arg5[%c0_15, %c0_16] : memref<240x20xf32, #tpu.memory_space<vmem>>, vector<240x20xf32>
    %cst_17 = arith.constant dense<0.000000e+00> : vector<34x20xf32>
    %53 = tpu.matmul %51, %52, %cst_17 {dimension_numbers = #tpu.dot_dimension_numbers<[1], [0], [0], [1], [0, 0, 1, 1], [], []>} : vector<34x240xf32>, vector<240x20xf32>, vector<34x20xf32> -> vector<34x20xf32>
    %c0_18 = arith.constant 0 : index
    %c112 = arith.constant 112 : index
    %54 = vector.load %arg6[%c0_18, %c112] : memref<1x132xf32, #tpu.memory_space<vmem>>, vector<1x20xf32>
    %55 = vector.broadcast %54 : vector<1x20xf32> to vector<34x20xf32>
    %56 = arith.addf %53, %55 : vector<34x20xf32>
    %57 = vector.extract_strided_slice %56 {offsets = [0, 0], sizes = [2, 20], strides = [1, 1]} : vector<34x20xf32> to vector<2x20xf32>
    %58 = vector.extract_strided_slice %56 {offsets = [2, 0], sizes = [2, 20], strides = [1, 1]} : vector<34x20xf32> to vector<2x20xf32>
    %59 = vector.extract_strided_slice %56 {offsets = [4, 0], sizes = [2, 20], strides = [1, 1]} : vector<34x20xf32> to vector<2x20xf32>
    %60 = vector.extract_strided_slice %56 {offsets = [6, 0], sizes = [2, 20], strides = [1, 1]} : vector<34x20xf32> to vector<2x20xf32>
    %61 = vector.extract_strided_slice %56 {offsets = [8, 0], sizes = [2, 20], strides = [1, 1]} : vector<34x20xf32> to vector<2x20xf32>
    %62 = vector.extract_strided_slice %56 {offsets = [10, 0], sizes = [2, 20], strides = [1, 1]} : vector<34x20xf32> to vector<2x20xf32>
    %63 = vector.extract_strided_slice %56 {offsets = [12, 0], sizes = [2, 20], strides = [1, 1]} : vector<34x20xf32> to vector<2x20xf32>
    %64 = vector.extract_strided_slice %56 {offsets = [14, 0], sizes = [2, 20], strides = [1, 1]} : vector<34x20xf32> to vector<2x20xf32>
    %65 = vector.extract_strided_slice %56 {offsets = [16, 0], sizes = [2, 20], strides = [1, 1]} : vector<34x20xf32> to vector<2x20xf32>
    %66 = vector.extract_strided_slice %56 {offsets = [18, 0], sizes = [2, 20], strides = [1, 1]} : vector<34x20xf32> to vector<2x20xf32>
    %67 = vector.extract_strided_slice %56 {offsets = [20, 0], sizes = [2, 20], strides = [1, 1]} : vector<34x20xf32> to vector<2x20xf32>
    %68 = vector.extract_strided_slice %56 {offsets = [22, 0], sizes = [2, 20], strides = [1, 1]} : vector<34x20xf32> to vector<2x20xf32>
    %69 = vector.extract_strided_slice %56 {offsets = [24, 0], sizes = [2, 20], strides = [1, 1]} : vector<34x20xf32> to vector<2x20xf32>
    %70 = vector.extract_strided_slice %56 {offsets = [26, 0], sizes = [2, 20], strides = [1, 1]} : vector<34x20xf32> to vector<2x20xf32>
    %71 = vector.extract_strided_slice %56 {offsets = [28, 0], sizes = [2, 20], strides = [1, 1]} : vector<34x20xf32> to vector<2x20xf32>
    %72 = vector.extract_strided_slice %56 {offsets = [30, 0], sizes = [2, 20], strides = [1, 1]} : vector<34x20xf32> to vector<2x20xf32>
    %73 = vector.extract_strided_slice %56 {offsets = [32, 0], sizes = [2, 20], strides = [1, 1]} : vector<34x20xf32> to vector<2x20xf32>
    %74 = tpu.concatenate %57, %58, %59, %60, %61, %62, %63, %64, %65, %66, %67, %68, %69, %70, %71, %72 in 1 : vector<2x20xf32>, vector<2x20xf32>, vector<2x20xf32>, vector<2x20xf32>, vector<2x20xf32>, vector<2x20xf32>, vector<2x20xf32>, vector<2x20xf32>, vector<2x20xf32>, vector<2x20xf32>, vector<2x20xf32>, vector<2x20xf32>, vector<2x20xf32>, vector<2x20xf32>, vector<2x20xf32>, vector<2x20xf32> -> vector<2x320xf32>
    %75 = tpu.concatenate %74, %73 in 1 : vector<2x320xf32>, vector<2x20xf32> -> vector<2x340xf32>
    %cst_19 = arith.constant dense<0.000000e+00> : vector<2xf32>
    %76 = vector.multi_reduction <add>, %75, %cst_19 [1] : vector<2x340xf32> to vector<2xf32>
    %77 = vector.shape_cast %76 : vector<2xf32> to vector<2x1xf32>
    %cst_20 = arith.constant 0.00294117653 : f32
    %78 = vector.broadcast %cst_20 : f32 to vector<2x1xf32>
    %79 = arith.mulf %77, %78 : vector<2x1xf32>
    %80 = vector.broadcast %79 : vector<2x1xf32> to vector<2x340xf32>
    %81 = arith.subf %75, %80 : vector<2x340xf32>
    %82 = arith.mulf %81, %81 : vector<2x340xf32>
    %cst_21 = arith.constant dense<0.000000e+00> : vector<2xf32>
    %83 = vector.multi_reduction <add>, %82, %cst_21 [1] : vector<2x340xf32> to vector<2xf32>
    %84 = vector.shape_cast %83 : vector<2xf32> to vector<2x1xf32>
    %cst_22 = arith.constant 0.00294117653 : f32
    %85 = vector.broadcast %cst_22 : f32 to vector<2x1xf32>
    %86 = arith.mulf %84, %85 : vector<2x1xf32>
    %cst_23 = arith.constant 9.99999974E-6 : f32
    %87 = vector.broadcast %cst_23 : f32 to vector<2x1xf32>
    %88 = arith.addf %86, %87 : vector<2x1xf32>
    %89 = math.rsqrt %88 : vector<2x1xf32>
    %90 = vector.broadcast %89 : vector<2x1xf32> to vector<2x340xf32>
    %91 = arith.mulf %81, %90 : vector<2x340xf32>
    %c0_24 = arith.constant 0 : index
    %c0_25 = arith.constant 0 : index
    %92 = vector.load %arg7[%c0_24, %c0_25] : memref<2x340xf32, #tpu.memory_space<vmem>>, vector<1x340xf32>
    %93 = vector.broadcast %92 : vector<1x340xf32> to vector<2x340xf32>
    %94 = arith.mulf %91, %93 : vector<2x340xf32>
    %c1_26 = arith.constant 1 : index
    %c0_27 = arith.constant 0 : index
    %95 = vector.load %arg7[%c1_26, %c0_27] : memref<2x340xf32, #tpu.memory_space<vmem>>, vector<1x340xf32>
    %96 = vector.broadcast %95 : vector<1x340xf32> to vector<2x340xf32>
    %97 = arith.addf %94, %96 : vector<2x340xf32>
    %c0_28 = arith.constant 0 : index
    %c0_29 = arith.constant 0 : index
    %98 = vector.load %arg8[%c0_28, %c0_29] : memref<340x64xf32, #tpu.memory_space<vmem>>, vector<340x64xf32>
    %cst_30 = arith.constant dense<0.000000e+00> : vector<2x64xf32>
    %99 = tpu.matmul %97, %98, %cst_30 {dimension_numbers = #tpu.dot_dimension_numbers<[1], [0], [0], [1], [0, 0, 1, 1], [], []>} : vector<2x340xf32>, vector<340x64xf32>, vector<2x64xf32> -> vector<2x64xf32>
    %c0_31 = arith.constant 0 : index
    %c0_32 = arith.constant 0 : index
    %100 = vector.load %arg12[%c0_31, %c0_32] : memref<1x240xf32, #tpu.memory_space<vmem>>, vector<1x64xf32>
    %101 = vector.broadcast %100 : vector<1x64xf32> to vector<2x64xf32>
    %102 = arith.addf %99, %101 : vector<2x64xf32>
    %cst_33 = arith.constant 0.000000e+00 : f32
    %103 = vector.broadcast %cst_33 : f32 to vector<2x64xf32>
    %104 = arith.maximumf %102, %103 : vector<2x64xf32>
    %c0_34 = arith.constant 0 : index
    %c0_35 = arith.constant 0 : index
    %105 = vector.load %arg9[%c0_34, %c0_35] : memref<64x32xf32, #tpu.memory_space<vmem>>, vector<64x32xf32>
    %cst_36 = arith.constant dense<0.000000e+00> : vector<2x32xf32>
    %106 = tpu.matmul %104, %105, %cst_36 {dimension_numbers = #tpu.dot_dimension_numbers<[1], [0], [0], [1], [0, 0, 1, 1], [], []>} : vector<2x64xf32>, vector<64x32xf32>, vector<2x32xf32> -> vector<2x32xf32>
    %c0_37 = arith.constant 0 : index
    %c64_38 = arith.constant 64 : index
    %107 = vector.load %arg12[%c0_37, %c64_38] : memref<1x240xf32, #tpu.memory_space<vmem>>, vector<1x32xf32>
    %108 = vector.broadcast %107 : vector<1x32xf32> to vector<2x32xf32>
    %109 = arith.addf %106, %108 : vector<2x32xf32>
    %cst_39 = arith.constant 0.00999999977 : f32
    %110 = vector.broadcast %cst_39 : f32 to vector<2x32xf32>
    %111 = arith.mulf %110, %109 : vector<2x32xf32>
    %112 = arith.maximumf %109, %111 : vector<2x32xf32>
    %c0_40 = arith.constant 0 : index
    %c0_41 = arith.constant 0 : index
    %113 = vector.load %arg2[%c0_40, %c0_41] : memref<2x16xf32, #tpu.memory_space<vmem>>, vector<2x8xf32>
    %114 = tpu.concatenate %112, %113 in 1 : vector<2x32xf32>, vector<2x8xf32> -> vector<2x40xf32>
    %c0_42 = arith.constant 0 : index
    %c0_43 = arith.constant 0 : index
    %115 = vector.load %arg10[%c0_42, %c0_43] : memref<40x16xf32, #tpu.memory_space<vmem>>, vector<40x16xf32>
    %cst_44 = arith.constant dense<0.000000e+00> : vector<2x16xf32>
    %116 = tpu.matmul %114, %115, %cst_44 {dimension_numbers = #tpu.dot_dimension_numbers<[1], [0], [0], [1], [0, 0, 1, 1], [], []>} : vector<2x40xf32>, vector<40x16xf32>, vector<2x16xf32> -> vector<2x16xf32>
    %c0_45 = arith.constant 0 : index
    %c96 = arith.constant 96 : index
    %117 = vector.load %arg12[%c0_45, %c96] : memref<1x240xf32, #tpu.memory_space<vmem>>, vector<1x16xf32>
    %118 = vector.broadcast %117 : vector<1x16xf32> to vector<2x16xf32>
    %119 = arith.addf %116, %118 : vector<2x16xf32>
    %cst_46 = arith.constant 0.00999999977 : f32
    %120 = vector.broadcast %cst_46 : f32 to vector<2x16xf32>
    %121 = arith.mulf %120, %119 : vector<2x16xf32>
    %122 = arith.maximumf %119, %121 : vector<2x16xf32>
    %c0_47 = arith.constant 0 : index
    %c8 = arith.constant 8 : index
    %123 = vector.load %arg2[%c0_47, %c8] : memref<2x16xf32, #tpu.memory_space<vmem>>, vector<2x8xf32>
    %124 = tpu.concatenate %122, %123 in 1 : vector<2x16xf32>, vector<2x8xf32> -> vector<2x24xf32>
    %c0_48 = arith.constant 0 : index
    %c0_49 = arith.constant 0 : index
    %125 = vector.load %arg11[%c0_48, %c0_49] : memref<24x128xf32, #tpu.memory_space<vmem>>, vector<24x128xf32>
    %cst_50 = arith.constant dense<0.000000e+00> : vector<2x128xf32>
    %126 = tpu.matmul %124, %125, %cst_50 {dimension_numbers = #tpu.dot_dimension_numbers<[1], [0], [0], [1], [0, 0, 1, 1], [], []>} : vector<2x24xf32>, vector<24x128xf32>, vector<2x128xf32> -> vector<2x128xf32>
    %c0_51 = arith.constant 0 : index
    %c112_52 = arith.constant 112 : index
    %127 = vector.load %arg12[%c0_51, %c112_52] : memref<1x240xf32, #tpu.memory_space<vmem>>, vector<1x128xf32>
    %128 = vector.broadcast %127 : vector<1x128xf32> to vector<2x128xf32>
    %129 = arith.addf %126, %128 : vector<2x128xf32>
    %c0_53 = arith.constant 0 : index
    %c0_54 = arith.constant 0 : index
    %130 = vector.load %arg13[%c0_53, %c0_54] : memref<2x128xf32, #tpu.memory_space<vmem>>, vector<2x128xf32>
    tpu.vector_store %arg13[%c0_53, %c0_54], %129 {strides = array<i32>} : memref<2x128xf32, #tpu.memory_space<vmem>>, vector<2x128xf32>,
    return
  }
  func.func @transform_0(%arg0: i32) -> (i32, i32, i32) {
    %c0_i32 = arith.constant 0 : i32
    %c0_i32_0 = arith.constant 0 : i32
    %c0_i32_1 = arith.constant 0 : i32
    %c0_i32_2 = arith.constant 0 : i32
    return %c0_i32, %c0_i32_0, %c0_i32_1 : i32, i32, i32
  }
  func.func @transform_1(%arg0: i32) -> (i32, i32) {
    %c0_i32 = arith.constant 0 : i32
    %c0_i32_0 = arith.constant 0 : i32
    %c0_i32_1 = arith.constant 0 : i32
    return %c0_i32, %c0_i32_0 : i32, i32
  }
  func.func @transform_2(%arg0: i32) -> (i32, i32) {
    %c0_i32 = arith.constant 0 : i32
    %c0_i32_0 = arith.constant 0 : i32
    %c0_i32_1 = arith.constant 0 : i32
    return %c0_i32, %c0_i32_0 : i32, i32
  }
  func.func @transform_3(%arg0: i32) -> (i32, i32) {
    %c0_i32 = arith.constant 0 : i32
    %c0_i32_0 = arith.constant 0 : i32
    %c0_i32_1 = arith.constant 0 : i32
    return %c0_i32, %c0_i32_0 : i32, i32
  }
  func.func @transform_4(%arg0: i32) -> (i32, i32) {
    %c0_i32 = arith.constant 0 : i32
    %c0_i32_0 = arith.constant 0 : i32
    %c0_i32_1 = arith.constant 0 : i32
    return %c0_i32, %c0_i32_0 : i32, i32
  }
  func.func @transform_5(%arg0: i32) -> (i32, i32) {
    %c0_i32 = arith.constant 0 : i32
    %c0_i32_0 = arith.constant 0 : i32
    %c0_i32_1 = arith.constant 0 : i32
    return %c0_i32, %c0_i32_0 : i32, i32
  }
  func.func @transform_6(%arg0: i32) -> (i32, i32) {
    %c0_i32 = arith.constant 0 : i32
    %c0_i32_0 = arith.constant 0 : i32
    %c0_i32_1 = arith.constant 0 : i32
    return %c0_i32, %c0_i32_0 : i32, i32
  }
  func.func @transform_7(%arg0: i32) -> (i32, i32) {
    %c0_i32 = arith.constant 0 : i32
    %c0_i32_0 = arith.constant 0 : i32
    %c0_i32_1 = arith.constant 0 : i32
    return %c0_i32, %c0_i32_0 : i32, i32
  }
  func.func @transform_8(%arg0: i32) -> (i32, i32) {
    %c0_i32 = arith.constant 0 : i32
    %c0_i32_0 = arith.constant 0 : i32
    %c0_i32_1 = arith.constant 0 : i32
    return %c0_i32, %c0_i32_0 : i32, i32
  }
  func.func @transform_9(%arg0: i32) -> (i32, i32) {
    %c0_i32 = arith.constant 0 : i32
    %c0_i32_0 = arith.constant 0 : i32
    %c0_i32_1 = arith.constant 0 : i32
    return %c0_i32, %c0_i32_0 : i32, i32
  }
  func.func @transform_10(%arg0: i32) -> (i32, i32) {
    %c0_i32 = arith.constant 0 : i32
    %c0_i32_0 = arith.constant 0 : i32
    %c0_i32_1 = arith.constant 0 : i32
    return %c0_i32, %c0_i32_0 : i32, i32
  }
  func.func @transform_11(%arg0: i32) -> (i32, i32) {
    %c0_i32 = arith.constant 0 : i32
    %c0_i32_0 = arith.constant 0 : i32
    %c0_i32_1 = arith.constant 0 : i32
    return %c0_i32, %c0_i32_0 : i32, i32
  }
  func.func @transform_12(%arg0: i32) -> (i32, i32) {
    %c0_i32 = arith.constant 0 : i32
    %c0_i32_0 = arith.constant 0 : i32
    %c0_i32_1 = arith.constant 0 : i32
    return %c0_i32, %c0_i32_0 : i32, i32
  }
}

</mosaic_0001>

<llo_original>
// kernel: critic_forward_pallas.1
$region0: #{critic_forward_pallas.1}
  #allocation0 [shape = 'u32[]', space=smem, size = 0x4, offset = 0x4, fixed_abs, tag = 'smem constant byte address 0x4 - core index']
  #allocation1 [shape = 'u32[144,128]{1,0:T(1,128)}', space=vmem, size = 0x12000, scoped, tag = 'internal scratch']
  %s0 = inlined_call_operand.vmem [shape: f32[2,50,32], index: 0, kind: input, shape index: {}]
  %s1 = inlined_call_operand.vmem [shape: f32[2,16], index: 1, kind: input, shape index: {}]
  %s2 = inlined_call_operand.vmem [shape: f32[160,64], index: 2, kind: input, shape index: {}]
  %s3 = inlined_call_operand.vmem [shape: f32[320,48], index: 3, kind: input, shape index: {}]
  %s4 = inlined_call_operand.vmem [shape: f32[240,20], index: 4, kind: input, shape index: {}]
  %s5 = inlined_call_operand.vmem [shape: f32[1,132], index: 5, kind: input, shape index: {}]
  %s6 = inlined_call_operand.vmem [shape: f32[2,340], index: 6, kind: input, shape index: {}]
  %s7 = inlined_call_operand.vmem [shape: f32[340,64], index: 7, kind: input, shape index: {}]
  %s8 = inlined_call_operand.vmem [shape: f32[64,32], index: 8, kind: input, shape index: {}]
  %s9 = inlined_call_operand.vmem [shape: f32[40,16], index: 9, kind: input, shape index: {}]
  %s10 = inlined_call_operand.vmem [shape: f32[24,128], index: 10, kind: input, shape index: {}]
  %s11 = inlined_call_operand.vmem [shape: f32[1,240], index: 11, kind: input, shape index: {}]
  %s12 = inlined_call_operand.vmem [shape: f32[2,128], index: 12, kind: output, shape index: {}]
  %s13 = sld [smem:[#allocation0]]
  $region58: #{critic_forward_pallas.1} parent=0
    _
  %s15 = ssub.s32 1, %s13
  %s16 = scalar_select 0, %s15, %s13
  // Predicated region
  $region2: #{critic_forward_pallas.1} parent=0 // pred_check
    _
  $region3: #{critic_forward_pallas.1} parent=0 // pred_check_branch
    %18 = sbr.rel (0) target = $region5
  $region4: #{critic_forward_pallas.1} parent=0 // pred_region
    _
  $region5: #{critic_forward_pallas.1} parent=0 // pred_fallthru
    _
  // Predicated region
  $region6: #{critic_forward_pallas.1} parent=0 // pred_check
    _
  $region7: #{critic_forward_pallas.1} parent=0 // pred_check_branch
    %20 = sbr.rel (0) target = $region9
  $region8: #{critic_forward_pallas.1} parent=0 // pred_region
    _
  $region9: #{critic_forward_pallas.1} parent=0 // pred_fallthru
    _
  // Predicated region
  $region10: #{critic_forward_pallas.1} parent=0 // pred_check
    _
  $region11: #{critic_forward_pallas.1} parent=0 // pred_check_branch
    %22 = sbr.rel (0) target = $region13
  $region12: #{critic_forward_pallas.1} parent=0 // pred_region
    _
  $region13: #{critic_forward_pallas.1} parent=0 // pred_fallthru
    _
  // Predicated region
  $region14: #{critic_forward_pallas.1} parent=0 // pred_check
    _
  $region15: #{critic_forward_pallas.1} parent=0 // pred_check_branch
    %24 = sbr.rel (0) target = $region17
  $region16: #{critic_forward_pallas.1} parent=0 // pred_region
    _
  $region17: #{critic_forward_pallas.1} parent=0 // pred_fallthru
    _
  // Predicated region
  $region18: #{critic_forward_pallas.1} parent=0 // pred_check
    _
  $region19: #{critic_forward_pallas.1} parent=0 // pred_check_branch
    %26 = sbr.rel (0) target = $region21
  $region20: #{critic_forward_pallas.1} parent=0 // pred_region
    _
  $region21: #{critic_forward_pallas.1} parent=0 // pred_fallthru
    _
  // Predicated region
  $region22: #{critic_forward_pallas.1} parent=0 // pred_check
    _
  $region23: #{critic_forward_pallas.1} parent=0 // pred_check_branch
    %28 = sbr.rel (0) target = $region25
  $region24: #{critic_forward_pallas.1} parent=0 // pred_region
    _
  $region25: #{critic_forward_pallas.1} parent=0 // pred_fallthru
    _
  // Predicated region
  $region26: #{critic_forward_pallas.1} parent=0 // pred_check
    _
  $region27: #{critic_forward_pallas.1} parent=0 // pred_check_branch
    %30 = sbr.rel (0) target = $region29
  $region28: #{critic_forward_pallas.1} parent=0 // pred_region
    _
  $region29: #{critic_forward_pallas.1} parent=0 // pred_fallthru
    _
  // Predicated region
  $region30: #{critic_forward_pallas.1} parent=0 // pred_check
    _
  $region31: #{critic_forward_pallas.1} parent=0 // pred_check_branch
    %32 = sbr.rel (0) target = $region33
  $region32: #{critic_forward_pallas.1} parent=0 // pred_region
    _
  $region33: #{critic_forward_pallas.1} parent=0 // pred_fallthru
    _
  // Predicated region
  $region34: #{critic_forward_pallas.1} parent=0 // pred_check
    _
  $region35: #{critic_forward_pallas.1} parent=0 // pred_check_branch
    %34 = sbr.rel (0) target = $region37
  $region36: #{critic_forward_pallas.1} parent=0 // pred_region
    _
  $region37: #{critic_forward_pallas.1} parent=0 // pred_fallthru
    _
  // Predicated region
  $region38: #{critic_forward_pallas.1} parent=0 // pred_check
    _
  $region39: #{critic_forward_pallas.1} parent=0 // pred_check_branch
    %36 = sbr.rel (0) target = $region41
  $region40: #{critic_forward_pallas.1} parent=0 // pred_region
    _
  $region41: #{critic_forward_pallas.1} parent=0 // pred_fallthru
    _
  // Predicated region
  $region42: #{critic_forward_pallas.1} parent=0 // pred_check
    _
  $region43: #{critic_forward_pallas.1} parent=0 // pred_check_branch
    %38 = sbr.rel (0) target = $region45
  $region44: #{critic_forward_pallas.1} parent=0 // pred_region
    _
  $region45: #{critic_forward_pallas.1} parent=0 // pred_fallthru
    _
  // Predicated region
  $region46: #{critic_forward_pallas.1} parent=0 // pred_check
    _
  $region47: #{critic_forward_pallas.1} parent=0 // pred_check_branch
    %40 = sbr.rel (0) target = $region49
  $region48: #{critic_forward_pallas.1} parent=0 // pred_region
    _
  $region49: #{critic_forward_pallas.1} parent=0 // pred_fallthru
    _
  %v41 = vld [vmem:[%s0] sm:$0xff]
  %v42 = vld [vmem:[%s0 + $0x8] sm:$0xff]
  %v43 = vld [vmem:[%s0 + $0x10] sm:$0xff]
  %v44 = vld [vmem:[%s0 + $0x18] sm:$0xff]
  %v45 = vld [vmem:[%s0 + $0x20] sm:$0xff]
  %v46 = vld [vmem:[%s0 + $0x28] sm:$0xff]
  %v47 = vld [vmem:[%s0 + $0x30] sm:$0x3]
  %s48 = scalar_lea.vmem %s0, 56
  %v49 = vld [vmem:[%s48] sm:$0xff]
  %v50 = vld [vmem:[%s48 + $0x8] sm:$0xff]
  %v51 = vld [vmem:[%s48 + $0x10] sm:$0xff]
  %v52 = vld [vmem:[%s48 + $0x18] sm:$0xff]
  %v53 = vld [vmem:[%s48 + $0x20] sm:$0xff]
  %v54 = vld [vmem:[%s48 + $0x28] sm:$0xff]
  %v55 = vld [vmem:[%s48 + $0x30] sm:$0x3]
  %62 = vrot.lane.b32.xlu0 %v49, 32
  %v63 = vpop.permute.xlu0 %62
  %64 = vrot.lane.b32.xlu0 %v50, 32
  %v65 = vpop.permute.xlu0 %64
  %66 = vrot.lane.b32.xlu0 %v51, 32
  %v67 = vpop.permute.xlu0 %66
  %68 = vrot.lane.b32.xlu0 %v52, 32
  %v69 = vpop.permute.xlu0 %68
  %70 = vrot.lane.b32.xlu0 %v53, 32
  %v71 = vpop.permute.xlu0 %70
  %72 = vrot.lane.b32.xlu0 %v54, 32
  %v73 = vpop.permute.xlu0 %72
  %vm86 = vcmask 1045504
  %v87 = vrot.slane %v41, 2
  %v88 = vrot.slane %v42, 2
  %v89 = vsel %vm86, %v87, %v88
  %v90 = vrot.slane %v43, 2
  %v91 = vsel %vm86, %v88, %v90
  %v92 = vrot.slane %v44, 2
  %v93 = vsel %vm86, %v90, %v92
  %v94 = vrot.slane %v45, 2
  %v95 = vsel %vm86, %v92, %v94
  %v96 = vrot.slane %v46, 2
  %v97 = vsel %vm86, %v94, %v96
  %98 = vrot.lane.b32.xlu0 %v89, 64
  %v99 = vpop.permute.xlu0 %98
  %100 = vrot.lane.b32.xlu0 %v91, 64
  %v101 = vpop.permute.xlu0 %100
  %102 = vrot.lane.b32.xlu0 %v93, 64
  %v103 = vpop.permute.xlu0 %102
  %104 = vrot.lane.b32.xlu0 %v95, 64
  %v105 = vpop.permute.xlu0 %104
  %106 = vrot.lane.b32.xlu0 %v97, 64
  %v107 = vpop.permute.xlu0 %106
  %108 = vrot.lane.b32.xlu0 %v96, 64
  %v109 = vpop.permute.xlu0 %108
  %v116 = vrot.slane %v49, 2
  %v117 = vrot.slane %v50, 2
  %v118 = vsel %vm86, %v116, %v117
  %v119 = vrot.slane %v51, 2
  %v120 = vsel %vm86, %v117, %v119
  %v121 = vrot.slane %v52, 2
  %v122 = vsel %vm86, %v119, %v121
  %v123 = vrot.slane %v53, 2
  %v124 = vsel %vm86, %v121, %v123
  %v125 = vrot.slane %v54, 2
  %v126 = vsel %vm86, %v123, %v125
  %127 = vrot.lane.b32.xlu0 %v118, 96
  %v128 = vpop.permute.xlu0 %127
  %129 = vrot.lane.b32.xlu0 %v120, 96
  %v130 = vpop.permute.xlu0 %129
  %131 = vrot.lane.b32.xlu0 %v122, 96
  %v132 = vpop.permute.xlu0 %131
  %133 = vrot.lane.b32.xlu0 %v124, 96
  %v134 = vpop.permute.xlu0 %133
  %135 = vrot.lane.b32.xlu0 %v126, 96
  %v136 = vpop.permute.xlu0 %135
  %137 = vrot.lane.b32.xlu0 %v125, 96
  %v138 = vpop.permute.xlu0 %137
  %vm146 = vcmask 1043456
  %v147 = vrot.slane %v41, 4
  %v148 = vrot.slane %v42, 4
  %v149 = vsel %vm146, %v147, %v148
  %v150 = vrot.slane %v43, 4
  %v151 = vsel %vm146, %v148, %v150
  %v152 = vrot.slane %v44, 4
  %v153 = vsel %vm146, %v150, %v152
  %v154 = vrot.slane %v45, 4
  %v155 = vsel %vm146, %v152, %v154
  %v156 = vrot.slane %v46, 4
  %v157 = vsel %vm146, %v154, %v156
  %v158 = vrot.slane %v47, 4
  %v159 = vsel %vm146, %v156, %v158
  %vm161 = vcmask 261120
  %v162 = vsel %vm161, %v41, %v63
  %v163 = vsel %vm161, %v42, %v65
  %v164 = vsel %vm161, %v43, %v67
  %v165 = vsel %vm161, %v44, %v69
  %v166 = vsel %vm161, %v45, %v71
  %v167 = vsel %vm161, %v46, %v73
  %vm168 = vcmask 523264
  %v169 = vsel %vm168, %v162, %v99
  %v170 = vsel %vm168, %v163, %v101
  %v171 = vsel %vm168, %v164, %v103
  %v172 = vsel %vm168, %v165, %v105
  %v173 = vsel %vm168, %v166, %v107
  %v174 = vsel %vm168, %v167, %v109
  %vm175 = vcmask 785408
  %v176 = vsel %vm175, %v169, %v128
  %v177 = vsel %vm175, %v170, %v130
  %v178 = vsel %vm175, %v171, %v132
  %v179 = vsel %vm175, %v172, %v134
  %v180 = vsel %vm175, %v173, %v136
  %v181 = vsel %vm175, %v174, %v138
  %182 = vrot.lane.b32.xlu0 %v89, 32
  %v183 = vpop.permute.xlu0 %182
  %184 = vrot.lane.b32.xlu0 %v91, 32
  %v185 = vpop.permute.xlu0 %184
  %186 = vrot.lane.b32.xlu0 %v93, 32
  %v187 = vpop.permute.xlu0 %186
  %188 = vrot.lane.b32.xlu0 %v95, 32
  %v189 = vpop.permute.xlu0 %188
  %190 = vrot.lane.b32.xlu0 %v97, 32
  %v191 = vpop.permute.xlu0 %190
  %192 = vrot.lane.b32.xlu0 %v96, 32
  %v193 = vpop.permute.xlu0 %192
  %200 = vrot.lane.b32.xlu0 %v118, 64
  %v201 = vpop.permute.xlu0 %200
  %202 = vrot.lane.b32.xlu0 %v120, 64
  %v203 = vpop.permute.xlu0 %202
  %204 = vrot.lane.b32.xlu0 %v122, 64
  %v205 = vpop.permute.xlu0 %204
  %206 = vrot.lane.b32.xlu0 %v124, 64
  %v207 = vpop.permute.xlu0 %206
  %208 = vrot.lane.b32.xlu0 %v126, 64
  %v209 = vpop.permute.xlu0 %208
  %210 = vrot.lane.b32.xlu0 %v125, 64
  %v211 = vpop.permute.xlu0 %210
  %218 = vrot.lane.b32.xlu0 %v149, 96
  %v219 = vpop.permute.xlu0 %218
  %220 = vrot.lane.b32.xlu0 %v151, 96
  %v221 = vpop.permute.xlu0 %220
  %222 = vrot.lane.b32.xlu0 %v153, 96
  %v223 = vpop.permute.xlu0 %222
  %224 = vrot.lane.b32.xlu0 %v155, 96
  %v225 = vpop.permute.xlu0 %224
  %226 = vrot.lane.b32.xlu0 %v157, 96
  %v227 = vpop.permute.xlu0 %226
  %228 = vrot.lane.b32.xlu0 %v159, 96
  %v229 = vpop.permute.xlu0 %228
  %v237 = vrot.slane %v49, 4
  %v238 = vrot.slane %v50, 4
  %v239 = vsel %vm146, %v237, %v238
  %v240 = vrot.slane %v51, 4
  %v241 = vsel %vm146, %v238, %v240
  %v242 = vrot.slane %v52, 4
  %v243 = vsel %vm146, %v240, %v242
  %v244 = vrot.slane %v53, 4
  %v245 = vsel %vm146, %v242, %v244
  %v246 = vrot.slane %v54, 4
  %v247 = vsel %vm146, %v244, %v246
  %v248 = vrot.slane %v55, 4
  %v249 = vsel %vm146, %v246, %v248
  %v250 = vsel %vm161, %v49, %v183
  %v251 = vsel %vm161, %v50, %v185
  %v252 = vsel %vm161, %v51, %v187
  %v253 = vsel %vm161, %v52, %v189
  %v254 = vsel %vm161, %v53, %v191
  %v255 = vsel %vm161, %v54, %v193
  %v256 = vsel %vm168, %v250, %v201
  %v257 = vsel %vm168, %v251, %v203
  %v258 = vsel %vm168, %v252, %v205
  %v259 = vsel %vm168, %v253, %v207
  %v260 = vsel %vm168, %v254, %v209
  %v261 = vsel %vm168, %v255, %v211
  %v262 = vsel %vm175, %v256, %v219
  %v263 = vsel %vm175, %v257, %v221
  %v264 = vsel %vm175, %v258, %v223
  %v265 = vsel %vm175, %v259, %v225
  %v266 = vsel %vm175, %v260, %v227
  %v267 = vsel %vm175, %v261, %v229
  %v274 = vrot.slane %v262, 2
  %v275 = vrot.slane %v239, 2
  %v276 = vrot.slane %v263, 2
  %v277 = vsel %vm86, %v274, %v276
  %v278 = vrot.slane %v241, 2
  %v279 = vsel %vm86, %v275, %v278
  %v280 = vrot.slane %v264, 2
  %v281 = vsel %vm86, %v276, %v280
  %v282 = vrot.slane %v243, 2
  %v283 = vsel %vm86, %v278, %v282
  %v284 = vrot.slane %v265, 2
  %v285 = vsel %vm86, %v280, %v284
  %v286 = vrot.slane %v245, 2
  %v287 = vsel %vm86, %v282, %v286
  %v288 = vrot.slane %v266, 2
  %v289 = vsel %vm86, %v284, %v288
  %v290 = vrot.slane %v247, 2
  %v291 = vsel %vm86, %v286, %v290
  %v292 = vrot.slane %v267, 2
  %v293 = vsel %vm86, %v288, %v292
  %v294 = vrot.slane %v249, 2
  %v295 = vsel %vm86, %v290, %v294
  %v304 = vsel %vm86, %v181, %v274
  %v305 = vsel %vm86, %v159, %v275
  %v306 = vld [vmem:[%s2] sm:$0xff]
  %v307 = vld [vmem:[%s2 + $0x8] sm:$0xff]
  %v308 = vld [vmem:[%s2 + $0x10] sm:$0xff]
  %v309 = vld [vmem:[%s2 + $0x18] sm:$0xff]
  %v310 = vld [vmem:[%s2 + $0x20] sm:$0xff]
  %v311 = vld [vmem:[%s2 + $0x28] sm:$0xff]
  %v312 = vld [vmem:[%s2 + $0x30] sm:$0xff]
  %v313 = vld [vmem:[%s2 + $0x38] sm:$0xff]
  %v314 = vld [vmem:[%s2 + $0x40] sm:$0xff]
  %v315 = vld [vmem:[%s2 + $0x48] sm:$0xff]
  %v316 = vld [vmem:[%s2 + $0x50] sm:$0xff]
  %v317 = vld [vmem:[%s2 + $0x58] sm:$0xff]
  %v318 = vld [vmem:[%s2 + $0x60] sm:$0xff]
  %v319 = vld [vmem:[%s2 + $0x68] sm:$0xff]
  %v320 = vld [vmem:[%s2 + $0x70] sm:$0xff]
  %v321 = vld [vmem:[%s2 + $0x78] sm:$0xff]
  %v322 = vld [vmem:[%s2 + $0x80] sm:$0xff]
  %v323 = vld [vmem:[%s2 + $0x88] sm:$0xff]
  %v324 = vld [vmem:[%s2 + $0x90] sm:$0xff]
  %v325 = vld [vmem:[%s2 + $0x98] sm:$0xff]
  %v326 = vld [vmem:[%s5] sm:$0x1]
  %v328 = vlaneseq
  %v329 = vshrl.u32 %v328, 7
  %v330 = vsub.s32 0, %v329
  %v331 = vrot.slane %v326, %v330
  %v333 = vsel %vm161, %v149, 0
  %v335 = vsel %vm161, %v151, 0
  %v337 = vsel %vm161, %v153, 0
  %v339 = vsel %vm161, %v155, 0
  %v341 = vsel %vm161, %v157, 0
  %v344 = vsel %vm161, %v305, 0
  %v346 = vsel %vm161, %v279, 0
  %v348 = vsel %vm161, %v283, 0
  %v350 = vsel %vm161, %v287, 0
  %v352 = vsel %vm161, %v291, 0
  %v354 = vsel %vm161, %v295, 0
  %v356 = vsel %vm161, %v294, 0
  %358 = vmatprep.subr.mxu0 0.0
  %359 = vmatpush1.msra.mxu0 %v306
  %360 = vmatprep.subr.mxu0 0.0
  %361 = vmatpush1.msra.mxu0 %v307
  %362 = vmatprep.subr.mxu0 0.0
  %363 = vmatpush1.msra.mxu0 %v308
  %364 = vmatprep.subr.mxu0 0.0
  %365 = vmatpush1.msra.mxu0 %v309
  %366 = vmatprep.subr.mxu0 0.0
  %367 = vmatpush1.msra.mxu0 %v310
  %368 = vmatprep.subr.mxu0 0.0
  %369 = vmatpush1.msra.mxu0 %v311
  %370 = vmatprep.subr.mxu0 0.0
  %371 = vmatpush1.msra.mxu0 %v312
  %372 = vmatprep.subr.mxu0 0.0
  %373 = vmatpush1.msra.mxu0 %v313
  %374 = vmatprep.subr.mxu0 0.0
  %375 = vmatpush1.msra.mxu0 %v314
  %376 = vmatprep.subr.mxu0 0.0
  %377 = vmatpush1.msra.mxu0 %v315
  %378 = vmatprep.subr.mxu0 0.0
  %379 = vmatpush1.msra.mxu0 %v316
  %380 = vmatprep.subr.mxu0 0.0
  %381 = vmatpush1.msra.mxu0 %v317
  %382 = vmatprep.subr.mxu0 0.0
  %383 = vmatpush1.msra.mxu0 %v318
  %384 = vmatprep.subr.mxu0 0.0
  %385 = vmatpush1.msra.mxu0 %v319
  %386 = vmatprep.subr.mxu0 0.0
  %387 = vmatpush1.msra.mxu0 %v320
  %388 = vmatprep.subr.mxu0 0.0
  %389 = vmatpush1.msra.mxu0 %v321
  %390 = vmatprep.subr.mxu0 0.0
  %391 = vmatpush1.msra.mxu0 %v322
  %392 = vmatprep.subr.mxu0 0.0
  %393 = vmatpush1.msra.mxu0 %v323
  %394 = vmatprep.subr.mxu0 0.0
  %395 = vmatpush1.msra.mxu0 %v324
  %396 = vmatprep.subr.mxu0 0.0
  %397 = vmatpush1.msra.mxu0 %v325
  %398 = vmatprep.subr.mxu0 0.0
  %399 = vmatpush1.msra.mxu0 0.0
  %400 = vmatprep.subr.mxu0 0.0
  %401 = vmatpush1.msra.mxu0 0.0
  %402 = vmatprep.subr.mxu0 0.0
  %403 = vmatpush1.msra.mxu0 0.0
  %404 = vmatprep.subr.mxu0 0.0
  %405 = vmatpush1.msra.mxu0 0.0
  %406 = vmatprep.subr.mxu0 0.0
  %407 = vmatpush1.msra.mxu0 0.0
  %408 = vmatprep.subr.mxu0 0.0
  %409 = vmatpush1.msra.mxu0 0.0
  %410 = vmatprep.subr.mxu0 0.0
  %411 = vmatpush1.msra.mxu0 0.0
  %412 = vmatprep.subr.mxu0 0.0
  %413 = vmatpush1.msra.mxu0 0.0
  %414 = vmatprep.subr.mxu0 0.0
  %415 = vmatpush1.msra.mxu0 0.0
  %416 = vmatprep.subr.mxu0 0.0
  %417 = vmatpush1.msra.mxu0 0.0
  %418 = vmatprep.subr.mxu0 0.0
  %419 = vmatpush1.msra.mxu0 0.0
  %420 = vmatprep.subr.mxu0 0.0
  %421 = vmatpush1.msra.mxu0 0.0
  %422 = vmatprep.mubr.f32.mxu0 %v333
  %423 = vmatmul.mubr.f32.gmra.mrb[0].mxu0 %v176
  %v424 = vpop.f32.mrb[0].mxu0
  %v425 = vadd.f32 %v331, %v424
  %v426 = vpop.f32.mrb[0].mxu0
  %427 = vmatprep.mubr.f32.mxu0 %v335
  %428 = vmatmul.mubr.f32.gmra.mrb[0].mxu0 %v177
  %v429 = vpop.f32.mrb[0].mxu0
  %v430 = vadd.f32 %v331, %v429
  %v431 = vpop.f32.mrb[0].mxu0
  %432 = vmatprep.mubr.f32.mxu0 %v337
  %433 = vmatmul.mubr.f32.gmra.mrb[0].mxu0 %v178
  %v434 = vpop.f32.mrb[0].mxu0
  %v435 = vadd.f32 %v331, %v434
  %v436 = vpop.f32.mrb[0].mxu0
  %437 = vmatprep.mubr.f32.mxu0 %v339
  %438 = vmatmul.mubr.f32.gmra.mrb[0].mxu0 %v179
  %v439 = vpop.f32.mrb[0].mxu0
  %v440 = vadd.f32 %v331, %v439
  %v441 = vpop.f32.mrb[0].mxu0
  %442 = vmatprep.mubr.f32.mxu0 %v341
  %443 = vmatmul.mubr.f32.gmra.mrb[0].mxu0 %v180
  %v444 = vpop.f32.mrb[0].mxu0
  %v445 = vadd.f32 %v331, %v444
  %v446 = vpop.f32.mrb[0].mxu0
  %447 = vmatprep.mubr.f32.mxu0 %v344
  %448 = vmatmul.mubr.f32.gmra.mrb[0].mxu0 %v304
  %v449 = vpop.f32.mrb[0].mxu0
  %v450 = vadd.f32 %v331, %v449
  %v451 = vpop.f32.mrb[0].mxu0
  %452 = vmatprep.mubr.f32.mxu0 %v346
  %453 = vmatmul.mubr.f32.gmra.mrb[0].mxu0 %v277
  %v454 = vpop.f32.mrb[0].mxu0
  %v455 = vadd.f32 %v331, %v454
  %v456 = vpop.f32.mrb[0].mxu0
  %457 = vmatprep.mubr.f32.mxu0 %v348
  %458 = vmatmul.mubr.f32.gmra.mrb[0].mxu0 %v281
  %v459 = vpop.f32.mrb[0].mxu0
  %v460 = vadd.f32 %v331, %v459
  %v461 = vpop.f32.mrb[0].mxu0
  %462 = vmatprep.mubr.f32.mxu0 %v350
  %463 = vmatmul.mubr.f32.gmra.mrb[0].mxu0 %v285
  %v464 = vpop.f32.mrb[0].mxu0
  %v465 = vadd.f32 %v331, %v464
  %v466 = vpop.f32.mrb[0].mxu0
  %467 = vmatprep.mubr.f32.mxu0 %v352
  %468 = vmatmul.mubr.f32.gmra.mrb[0].mxu0 %v289
  %v469 = vpop.f32.mrb[0].mxu0
  %v470 = vadd.f32 %v331, %v469
  %v471 = vpop.f32.mrb[0].mxu0
  %472 = vmatprep.mubr.f32.mxu0 %v354
  %473 = vmatmul.mubr.f32.gmra.mrb[0].mxu0 %v293
  %v474 = vpop.f32.mrb[0].mxu0
  %v475 = vadd.f32 %v331, %v474
  %v476 = vpop.f32.mrb[0].mxu0
  %477 = vmatprep.mubr.f32.mxu0 %v356
  %478 = vmatmul.mubr.f32.gmra.mrb[0].mxu0 %v292
  %v479 = vpop.f32.mrb[0].mxu0
  %v480 = vadd.f32 %v331, %v479
  %v481 = vpop.f32.mrb[0].mxu0
  %482 = vdwg.mxu0
  %v483 = vmul.f32 %v425, 0.01
  %v484 = vmul.f32 %v430, 0.01
  %v485 = vmul.f32 %v435, 0.01
  %v486 = vmul.f32 %v440, 0.01
  %v487 = vmul.f32 %v445, 0.01
  %v488 = vmul.f32 %v450, 0.01
  %v489 = vmul.f32 %v455, 0.01
  %v490 = vmul.f32 %v460, 0.01
  %v491 = vmul.f32 %v465, 0.01
  %v492 = vmul.f32 %v470, 0.01
  %v493 = vmul.f32 %v475, 0.01
  %v494 = vmul.f32 %v480, 0.01
  %v495 = vmax.f32 %v425, %v483
  %v496 = vmax.f32 %v430, %v484
  %v497 = vmax.f32 %v435, %v485
  %v498 = vmax.f32 %v440, %v486
  %v499 = vmax.f32 %v445, %v487
  %v500 = vmax.f32 %v450, %v488
  %v501 = vmax.f32 %v455, %v489
  %v502 = vmax.f32 %v460, %v490
  %v503 = vmax.f32 %v465, %v491
  %v504 = vmax.f32 %v470, %v492
  %v505 = vmax.f32 %v475, %v493
  %v506 = vmax.f32 %v480, %v494
  %vm513 = vcmask 1041408
  %v514 = vrot.slane %v500, 6
  %v515 = vrot.slane %v501, 6
  %v516 = vsel %vm513, %v514, %v515
  %v517 = vrot.slane %v502, 6
  %v518 = vsel %vm513, %v515, %v517
  %v519 = vrot.slane %v503, 6
  %v520 = vsel %vm513, %v517, %v519
  %v521 = vrot.slane %v504, 6
  %v522 = vsel %vm513, %v519, %v521
  %v523 = vrot.slane %v505, 6
  %v524 = vsel %vm513, %v521, %v523
  %525 = vrot.lane.b32.xlu0 %v516, 64
  %v526 = vpop.permute.xlu0 %525
  %527 = vrot.lane.b32.xlu0 %v518, 64
  %v528 = vpop.permute.xlu0 %527
  %529 = vrot.lane.b32.xlu0 %v520, 64
  %v530 = vpop.permute.xlu0 %529
  %531 = vrot.lane.b32.xlu0 %v522, 64
  %v532 = vpop.permute.xlu0 %531
  %533 = vrot.lane.b32.xlu0 %v524, 64
  %v534 = vpop.permute.xlu0 %533
  %535 = vrot.lane.b32.xlu0 %v523, 64
  %v536 = vpop.permute.xlu0 %535
  %v548 = vrot.slane %v495, 2
  %v549 = vrot.slane %v496, 2
  %v550 = vsel %vm86, %v548, %v549
  %v551 = vrot.slane %v497, 2
  %v552 = vsel %vm86, %v549, %v551
  %v553 = vrot.slane %v498, 2
  %v554 = vsel %vm86, %v551, %v553
  %v555 = vrot.slane %v499, 2
  %v556 = vsel %vm86, %v553, %v555
  %v557 = vrot.slane %v500, 2
  %v558 = vsel %vm86, %v555, %v557
  %566 = vrot.lane.b32.xlu0 %v501, 64
  %v567 = vpop.permute.xlu0 %566
  %568 = vrot.lane.b32.xlu0 %v502, 64
  %v569 = vpop.permute.xlu0 %568
  %570 = vrot.lane.b32.xlu0 %v503, 64
  %v571 = vpop.permute.xlu0 %570
  %572 = vrot.lane.b32.xlu0 %v504, 64
  %v573 = vpop.permute.xlu0 %572
  %574 = vrot.lane.b32.xlu0 %v505, 64
  %v575 = vpop.permute.xlu0 %574
  %576 = vrot.lane.b32.xlu0 %v506, 64
  %v577 = vpop.permute.xlu0 %576
  %v584 = vrot.slane %v495, 4
  %v585 = vrot.slane %v496, 4
  %v586 = vsel %vm146, %v584, %v585
  %v587 = vrot.slane %v497, 4
  %v588 = vsel %vm146, %v585, %v587
  %v589 = vrot.slane %v498, 4
  %v590 = vsel %vm146, %v587, %v589
  %v591 = vrot.slane %v499, 4
  %v592 = vsel %vm146, %v589, %v591
  %v593 = vrot.slane %v500, 4
  %v594 = vsel %vm146, %v591, %v593
  %v596 = vsel %vm168, %v495, %v526
  %v597 = vsel %vm168, %v496, %v528
  %v598 = vsel %vm168, %v497, %v530
  %v599 = vsel %vm168, %v498, %v532
  %v600 = vsel %vm168, %v499, %v534
  %v601 = vsel %vm168, %v500, %v536
  %v602 = vsel %vm168, %v550, %v567
  %v603 = vsel %vm168, %v552, %v569
  %v604 = vsel %vm168, %v554, %v571
  %v605 = vsel %vm168, %v556, %v573
  %v606 = vsel %vm168, %v558, %v575
  %v607 = vsel %vm168, %v557, %v577
  %608 = vrot.lane.b32.xlu0 %v584, 64
  %v609 = vpop.permute.xlu0 %608
  %610 = vrot.lane.b32.xlu0 %v586, 64
  %v611 = vpop.permute.xlu0 %610
  %612 = vrot.lane.b32.xlu0 %v588, 64
  %v613 = vpop.permute.xlu0 %612
  %614 = vrot.lane.b32.xlu0 %v590, 64
  %v615 = vpop.permute.xlu0 %614
  %616 = vrot.lane.b32.xlu0 %v592, 64
  %v617 = vpop.permute.xlu0 %616
  %618 = vrot.lane.b32.xlu0 %v594, 64
  %v619 = vpop.permute.xlu0 %618
  %v626 = vrot.slane %v501, 2
  %v627 = vrot.slane %v502, 2
  %v628 = vsel %vm86, %v626, %v627
  %v629 = vrot.slane %v503, 2
  %v630 = vsel %vm86, %v627, %v629
  %v631 = vrot.slane %v504, 2
  %v632 = vsel %vm86, %v629, %v631
  %v633 = vrot.slane %v505, 2
  %v634 = vsel %vm86, %v631, %v633
  %v635 = vrot.slane %v506, 2
  %v636 = vsel %vm86, %v633, %v635
  %v643 = vrot.slane %v495, 6
  %v644 = vrot.slane %v496, 6
  %v645 = vsel %vm513, %v643, %v644
  %v646 = vrot.slane %v497, 6
  %v647 = vsel %vm513, %v644, %v646
  %v648 = vrot.slane %v498, 6
  %v649 = vsel %vm513, %v646, %v648
  %v650 = vrot.slane %v499, 6
  %v651 = vsel %vm513, %v648, %v650
  %v652 = vsel %vm513, %v650, %v514
  %653 = vrot.lane.b32.xlu0 %v643, 64
  %v654 = vpop.permute.xlu0 %653
  %655 = vrot.lane.b32.xlu0 %v645, 64
  %v656 = vpop.permute.xlu0 %655
  %657 = vrot.lane.b32.xlu0 %v647, 64
  %v658 = vpop.permute.xlu0 %657
  %659 = vrot.lane.b32.xlu0 %v649, 64
  %v660 = vpop.permute.xlu0 %659
  %661 = vrot.lane.b32.xlu0 %v651, 64
  %v662 = vpop.permute.xlu0 %661
  %663 = vrot.lane.b32.xlu0 %v652, 64
  %v664 = vpop.permute.xlu0 %663
  %v671 = vrot.slane %v501, 4
  %v672 = vrot.slane %v502, 4
  %v673 = vsel %vm146, %v671, %v672
  %v674 = vrot.slane %v503, 4
  %v675 = vsel %vm146, %v672, %v674
  %v676 = vrot.slane %v504, 4
  %v677 = vsel %vm146, %v674, %v676
  %v678 = vrot.slane %v505, 4
  %v679 = vsel %vm146, %v676, %v678
  %v680 = vrot.slane %v506, 4
  %v681 = vsel %vm146, %v678, %v680
  %v682 = vsel %vm168, %v500, %v609
  %v683 = vsel %vm168, %v501, %v611
  %v684 = vsel %vm168, %v502, %v613
  %v685 = vsel %vm168, %v503, %v615
  %v686 = vsel %vm168, %v504, %v617
  %v687 = vsel %vm168, %v505, %v619
  %v688 = vsel %vm168, %v626, %v654
  %v689 = vsel %vm168, %v628, %v656
  %v690 = vsel %vm168, %v630, %v658
  %v691 = vsel %vm168, %v632, %v660
  %v692 = vsel %vm168, %v634, %v662
  %v693 = vsel %vm168, %v636, %v664
  %v706 = vrot.slane %v682, 4
  %v707 = vrot.slane %v683, 4
  %v708 = vsel %vm146, %v706, %v707
  %v709 = vrot.slane %v688, 4
  %v710 = vrot.slane %v689, 4
  %v711 = vsel %vm146, %v709, %v710
  %v712 = vrot.slane %v671, 4
  %v713 = vrot.slane %v673, 4
  %v714 = vsel %vm146, %v712, %v713
  %v715 = vrot.slane %v684, 4
  %v716 = vsel %vm146, %v707, %v715
  %v717 = vrot.slane %v690, 4
  %v718 = vsel %vm146, %v710, %v717
  %v719 = vrot.slane %v675, 4
  %v720 = vsel %vm146, %v713, %v719
  %v721 = vrot.slane %v685, 4
  %v722 = vsel %vm146, %v715, %v721
  %v723 = vrot.slane %v691, 4
  %v724 = vsel %vm146, %v717, %v723
  %v725 = vrot.slane %v677, 4
  %v726 = vsel %vm146, %v719, %v725
  %v727 = vrot.slane %v686, 4
  %v728 = vsel %vm146, %v721, %v727
  %v729 = vrot.slane %v692, 4
  %v730 = vsel %vm146, %v723, %v729
  %v731 = vrot.slane %v679, 4
  %v732 = vsel %vm146, %v725, %v731
  %v733 = vrot.slane %v687, 4
  %v734 = vsel %vm146, %v727, %v733
  %v735 = vrot.slane %v693, 4
  %v736 = vsel %vm146, %v729, %v735
  %v737 = vrot.slane %v681, 4
  %v738 = vsel %vm146, %v731, %v737
  %v752 = vsel %vm513, %v601, %v708
  %v753 = vsel %vm513, %v607, %v711
  %v754 = vsel %vm513, %v593, %v714
  %v755 = vld [vmem:[%s3] sm:$0xff]
  %v756 = vld [vmem:[%s3 + $0x8] sm:$0xff]
  %v757 = vld [vmem:[%s3 + $0x10] sm:$0xff]
  %v758 = vld [vmem:[%s3 + $0x18] sm:$0xff]
  %v759 = vld [vmem:[%s3 + $0x20] sm:$0xff]
  %v760 = vld [vmem:[%s3 + $0x28] sm:$0xff]
  %v761 = vld [vmem:[%s3 + $0x30] sm:$0xff]
  %v762 = vld [vmem:[%s3 + $0x38] sm:$0xff]
  %v763 = vld [vmem:[%s3 + $0x40] sm:$0xff]
  %v764 = vld [vmem:[%s3 + $0x48] sm:$0xff]
  %v765 = vld [vmem:[%s3 + $0x50] sm:$0xff]
  %v766 = vld [vmem:[%s3 + $0x58] sm:$0xff]
  %v767 = vld [vmem:[%s3 + $0x60] sm:$0xff]
  %v768 = vld [vmem:[%s3 + $0x68] sm:$0xff]
  %v769 = vld [vmem:[%s3 + $0x70] sm:$0xff]
  %v770 = vld [vmem:[%s3 + $0x78] sm:$0xff]
  %v771 = vld [vmem:[%s3 + $0x80] sm:$0xff]
  %v772 = vld [vmem:[%s3 + $0x88] sm:$0xff]
  %v773 = vld [vmem:[%s3 + $0x90] sm:$0xff]
  %v774 = vld [vmem:[%s3 + $0x98] sm:$0xff]
  %v775 = vld [vmem:[%s3 + $0xa0] sm:$0xff]
  %v776 = vld [vmem:[%s3 + $0xa8] sm:$0xff]
  %v777 = vld [vmem:[%s3 + $0xb0] sm:$0xff]
  %v778 = vld [vmem:[%s3 + $0xb8] sm:$0xff]
  %v779 = vld [vmem:[%s3 + $0xc0] sm:$0xff]
  %v780 = vld [vmem:[%s3 + $0xc8] sm:$0xff]
  %v781 = vld [vmem:[%s3 + $0xd0] sm:$0xff]
  %v782 = vld [vmem:[%s3 + $0xd8] sm:$0xff]
  %v783 = vld [vmem:[%s3 + $0xe0] sm:$0xff]
  %v784 = vld [vmem:[%s3 + $0xe8] sm:$0xff]
  %v785 = vld [vmem:[%s3 + $0xf0] sm:$0xff]
  %v786 = vld [vmem:[%s3 + $0xf8] sm:$0xff]
  %v787 = vld [vmem:[%s3 + $0x100] sm:$0xff]
  %v788 = vld [vmem:[%s3 + $0x108] sm:$0xff]
  %v789 = vld [vmem:[%s3 + $0x110] sm:$0xff]
  %v790 = vld [vmem:[%s3 + $0x118] sm:$0xff]
  %v791 = vld [vmem:[%s3 + $0x120] sm:$0xff]
  %v792 = vld [vmem:[%s3 + $0x128] sm:$0xff]
  %v793 = vld [vmem:[%s3 + $0x130] sm:$0xff]
  %v794 = vld [vmem:[%s3 + $0x138] sm:$0xff]
  %795 = vrot.lane.b32.xlu0 %v331, 64
  %v796 = vpop.permute.xlu0 %795
  %v798 = vsel %vm168, %v586, 0
  %v800 = vsel %vm168, %v588, 0
  %v802 = vsel %vm168, %v590, 0
  %v804 = vsel %vm168, %v592, 0
  %v806 = vsel %vm168, %v594, 0
  %v809 = vsel %vm168, %v754, 0
  %v811 = vsel %vm168, %v720, 0
  %v813 = vsel %vm168, %v726, 0
  %v815 = vsel %vm168, %v732, 0
  %v817 = vsel %vm168, %v738, 0
  %v819 = vsel %vm168, %v737, 0
  %821 = vmatprep.subr.mxu0 0.0
  %822 = vmatpush1.msra.mxu0 %v755
  %823 = vmatprep.subr.mxu0 0.0
  %824 = vmatpush1.msra.mxu0 %v756
  %825 = vmatprep.subr.mxu0 0.0
  %826 = vmatpush1.msra.mxu0 %v757
  %827 = vmatprep.subr.mxu0 0.0
  %828 = vmatpush1.msra.mxu0 %v758
  %829 = vmatprep.subr.mxu0 0.0
  %830 = vmatpush1.msra.mxu0 %v759
  %831 = vmatprep.subr.mxu0 0.0
  %832 = vmatpush1.msra.mxu0 %v760
  %833 = vmatprep.subr.mxu0 0.0
  %834 = vmatpush1.msra.mxu0 %v761
  %835 = vmatprep.subr.mxu0 0.0
  %836 = vmatpush1.msra.mxu0 %v762
  %837 = vmatprep.subr.mxu0 0.0
  %838 = vmatpush1.msra.mxu0 %v763
  %839 = vmatprep.subr.mxu0 0.0
  %840 = vmatpush1.msra.mxu0 %v764
  %841 = vmatprep.subr.mxu0 0.0
  %842 = vmatpush1.msra.mxu0 %v765
  %843 = vmatprep.subr.mxu0 0.0
  %844 = vmatpush1.msra.mxu0 %v766
  %845 = vmatprep.subr.mxu0 0.0
  %846 = vmatpush1.msra.mxu0 %v767
  %847 = vmatprep.subr.mxu0 0.0
  %848 = vmatpush1.msra.mxu0 %v768
  %849 = vmatprep.subr.mxu0 0.0
  %850 = vmatpush1.msra.mxu0 %v769
  %851 = vmatprep.subr.mxu0 0.0
  %852 = vmatpush1.msra.mxu0 %v770
  %853 = vmatprep.subr.mxu0 0.0
  %854 = vmatpush1.msra.mxu0 %v771
  %855 = vmatprep.subr.mxu0 0.0
  %856 = vmatpush1.msra.mxu0 %v772
  %857 = vmatprep.subr.mxu0 0.0
  %858 = vmatpush1.msra.mxu0 %v773
  %859 = vmatprep.subr.mxu0 0.0
  %860 = vmatpush1.msra.mxu0 %v774
  %861 = vmatprep.subr.mxu0 0.0
  %862 = vmatpush1.msra.mxu0 %v775
  %863 = vmatprep.subr.mxu0 0.0
  %864 = vmatpush1.msra.mxu0 %v776
  %865 = vmatprep.subr.mxu0 0.0
  %866 = vmatpush1.msra.mxu0 %v777
  %867 = vmatprep.subr.mxu0 0.0
  %868 = vmatpush1.msra.mxu0 %v778
  %869 = vmatprep.subr.mxu0 0.0
  %870 = vmatpush1.msra.mxu0 %v779
  %871 = vmatprep.subr.mxu0 0.0
  %872 = vmatpush1.msra.mxu0 %v780
  %873 = vmatprep.subr.mxu0 0.0
  %874 = vmatpush1.msra.mxu0 %v781
  %875 = vmatprep.subr.mxu0 0.0
  %876 = vmatpush1.msra.mxu0 %v782
  %877 = vmatprep.subr.mxu0 0.0
  %878 = vmatpush1.msra.mxu0 %v783
  %879 = vmatprep.subr.mxu0 0.0
  %880 = vmatpush1.msra.mxu0 %v784
  %881 = vmatprep.subr.mxu0 0.0
  %882 = vmatpush1.msra.mxu0 %v785
  %883 = vmatprep.subr.mxu0 0.0
  %884 = vmatpush1.msra.mxu0 %v786
  %885 = vmatprep.mubr.f32.mxu0 %v602
  %886 = vmatmul.mubr.f32.gmra.mrb[0].mxu0 %v596
  %v887 = vpop.f32.mrb[0].mxu0
  %v888 = vadd.f32 %v796, %v887
  %v889 = vpop.f32.mrb[0].mxu0
  %890 = vmatprep.mubr.f32.mxu0 %v603
  %891 = vmatmul.mubr.f32.gmra.mrb[0].mxu0 %v597
  %v892 = vpop.f32.mrb[0].mxu0
  %v893 = vadd.f32 %v796, %v892
  %v894 = vpop.f32.mrb[0].mxu0
  %895 = vmatprep.mubr.f32.mxu0 %v604
  %896 = vmatmul.mubr.f32.gmra.mrb[0].mxu0 %v598
  %v897 = vpop.f32.mrb[0].mxu0
  %v898 = vadd.f32 %v796, %v897
  %v899 = vpop.f32.mrb[0].mxu0
  %900 = vmatprep.mubr.f32.mxu0 %v605
  %901 = vmatmul.mubr.f32.gmra.mrb[0].mxu0 %v599
  %v902 = vpop.f32.mrb[0].mxu0
  %v903 = vadd.f32 %v796, %v902
  %v904 = vpop.f32.mrb[0].mxu0
  %905 = vmatprep.mubr.f32.mxu0 %v606
  %906 = vmatmul.mubr.f32.gmra.mrb[0].mxu0 %v600
  %v907 = vpop.f32.mrb[0].mxu0
  %v908 = vadd.f32 %v796, %v907
  %v909 = vpop.f32.mrb[0].mxu0
  %910 = vmatprep.mubr.f32.mxu0 %v753
  %911 = vmatmul.mubr.f32.gmra.mrb[0].mxu0 %v752
  %v912 = vpop.f32.mrb[0].mxu0
  %v913 = vadd.f32 %v796, %v912
  %v914 = vpop.f32.mrb[0].mxu0
  %915 = vmatprep.mubr.f32.mxu0 %v718
  %916 = vmatmul.mubr.f32.gmra.mrb[0].mxu0 %v716
  %v917 = vpop.f32.mrb[0].mxu0
  %v918 = vadd.f32 %v796, %v917
  %v919 = vpop.f32.mrb[0].mxu0
  %920 = vmatprep.mubr.f32.mxu0 %v724
  %921 = vmatmul.mubr.f32.gmra.mrb[0].mxu0 %v722
  %v922 = vpop.f32.mrb[0].mxu0
  %v923 = vadd.f32 %v796, %v922
  %v924 = vpop.f32.mrb[0].mxu0
  %925 = vmatprep.mubr.f32.mxu0 %v730
  %926 = vmatmul.mubr.f32.gmra.mrb[0].mxu0 %v728
  %v927 = vpop.f32.mrb[0].mxu0
  %v928 = vadd.f32 %v796, %v927
  %v929 = vpop.f32.mrb[0].mxu0
  %930 = vmatprep.mubr.f32.mxu0 %v736
  %931 = vmatmul.mubr.f32.gmra.mrb[0].mxu0 %v734
  %v932 = vpop.f32.mrb[0].mxu0
  %v933 = vadd.f32 %v796, %v932
  %v934 = vpop.f32.mrb[0].mxu0
  %935 = vmatprep.mubr.f32.mxu0 %v735
  %936 = vmatmul.mubr.f32.gmra.mrb[0].mxu0 %v733
  %v937 = vpop.f32.mrb[0].mxu0
  %v938 = vadd.f32 %v796, %v937
  %v939 = vpop.f32.mrb[0].mxu0
  %940 = vdwg.mxu0
  %941 = vmatprep.subr.mxu0 0.0
  %942 = vmatpush1.msra.mxu0 %v787
  %943 = vmatprep.subr.mxu0 0.0
  %944 = vmatpush1.msra.mxu0 %v788
  %945 = vmatprep.subr.mxu0 0.0
  %946 = vmatpush1.msra.mxu0 %v789
  %947 = vmatprep.subr.mxu0 0.0
  %948 = vmatpush1.msra.mxu0 %v790
  %949 = vmatprep.subr.mxu0 0.0
  %950 = vmatpush1.msra.mxu0 %v791
  %951 = vmatprep.subr.mxu0 0.0
  %952 = vmatpush1.msra.mxu0 %v792
  %953 = vmatprep.subr.mxu0 0.0
  %954 = vmatpush1.msra.mxu0 %v793
  %955 = vmatprep.subr.mxu0 0.0
  %956 = vmatpush1.msra.mxu0 %v794
  %957 = vmatprep.subr.mxu0 0.0
  %958 = vmatpush1.msra.mxu0 0.0
  %959 = vmatprep.subr.mxu0 0.0
  %960 = vmatpush1.msra.mxu0 0.0
  %961 = vmatprep.subr.mxu0 0.0
  %962 = vmatpush1.msra.mxu0 0.0
  %963 = vmatprep.subr.mxu0 0.0
  %964 = vmatpush1.msra.mxu0 0.0
  %965 = vmatprep.subr.mxu0 0.0
  %966 = vmatpush1.msra.mxu0 0.0
  %967 = vmatprep.subr.mxu0 0.0
  %968 = vmatpush1.msra.mxu0 0.0
  %969 = vmatprep.subr.mxu0 0.0
  %970 = vmatpush1.msra.mxu0 0.0
  %971 = vmatprep.subr.mxu0 0.0
  %972 = vmatpush1.msra.mxu0 0.0
  %973 = vmatprep.subr.mxu0 0.0
  %974 = vmatpush1.msra.mxu0 0.0
  %975 = vmatprep.subr.mxu0 0.0
  %976 = vmatpush1.msra.mxu0 0.0
  %977 = vmatprep.subr.mxu0 0.0
  %978 = vmatpush1.msra.mxu0 0.0
  %979 = vmatprep.subr.mxu0 0.0
  %980 = vmatpush1.msra.mxu0 0.0
  %981 = vmatprep.subr.mxu0 0.0
  %982 = vmatpush1.msra.mxu0 0.0
  %983 = vmatprep.subr.mxu0 0.0
  %984 = vmatpush1.msra.mxu0 0.0
  %985 = vmatprep.subr.mxu0 0.0
  %986 = vmatpush1.msra.mxu0 0.0
  %987 = vmatprep.subr.mxu0 0.0
  %988 = vmatpush1.msra.mxu0 0.0
  %989 = vmatprep.subr.mxu0 0.0
  %990 = vmatpush1.msra.mxu0 0.0
  %991 = vmatprep.subr.mxu0 0.0
  %992 = vmatpush1.msra.mxu0 0.0
  %993 = vmatprep.subr.mxu0 0.0
  %994 = vmatpush1.msra.mxu0 0.0
  %995 = vmatprep.subr.mxu0 0.0
  %996 = vmatpush1.msra.mxu0 0.0
  %997 = vmatprep.subr.mxu0 0.0
  %998 = vmatpush1.msra.mxu0 0.0
  %999 = vmatprep.subr.mxu0 0.0
  %1000 = vmatpush1.msra.mxu0 0.0
  %1001 = vmatprep.subr.mxu0 0.0
  %1002 = vmatpush1.msra.mxu0 0.0
  %1003 = vmatprep.subr.mxu0 0.0
  %1004 = vmatpush1.msra.mxu0 0.0
  %1005 = vmatprep.mubr.f32.mxu0 0.0
  %1006 = vmatmul.mubr.f32.gmra.mrb[0].mxu0 %v798
  %v1007 = vpop.f32.mrb[0].mxu0
  %v1008 = vadd.f32 %v888, %v1007
  %v1009 = vpop.f32.mrb[0].mxu0
  %1010 = vmatprep.mubr.f32.mxu0 0.0
  %1011 = vmatmul.mubr.f32.gmra.mrb[0].mxu0 %v800
  %v1012 = vpop.f32.mrb[0].mxu0
  %v1013 = vadd.f32 %v893, %v1012
  %v1014 = vpop.f32.mrb[0].mxu0
  %1015 = vmatprep.mubr.f32.mxu0 0.0
  %1016 = vmatmul.mubr.f32.gmra.mrb[0].mxu0 %v802
  %v1017 = vpop.f32.mrb[0].mxu0
  %v1018 = vadd.f32 %v898, %v1017
  %v1019 = vpop.f32.mrb[0].mxu0
  %1020 = vmatprep.mubr.f32.mxu0 0.0
  %1021 = vmatmul.mubr.f32.gmra.mrb[0].mxu0 %v804
  %v1022 = vpop.f32.mrb[0].mxu0
  %v1023 = vadd.f32 %v903, %v1022
  %v1024 = vpop.f32.mrb[0].mxu0
  %1025 = vmatprep.mubr.f32.mxu0 0.0
  %1026 = vmatmul.mubr.f32.gmra.mrb[0].mxu0 %v806
  %v1027 = vpop.f32.mrb[0].mxu0
  %v1028 = vadd.f32 %v908, %v1027
  %v1029 = vpop.f32.mrb[0].mxu0
  %1030 = vmatprep.mubr.f32.mxu0 0.0
  %1031 = vmatmul.mubr.f32.gmra.mrb[0].mxu0 %v809
  %v1032 = vpop.f32.mrb[0].mxu0
  %v1033 = vadd.f32 %v913, %v1032
  %v1034 = vpop.f32.mrb[0].mxu0
  %1035 = vmatprep.mubr.f32.mxu0 0.0
  %1036 = vmatmul.mubr.f32.gmra.mrb[0].mxu0 %v811
  %v1037 = vpop.f32.mrb[0].mxu0
  %v1038 = vadd.f32 %v918, %v1037
  %v1039 = vpop.f32.mrb[0].mxu0
  %1040 = vmatprep.mubr.f32.mxu0 0.0
  %1041 = vmatmul.mubr.f32.gmra.mrb[0].mxu0 %v813
  %v1042 = vpop.f32.mrb[0].mxu0
  %v1043 = vadd.f32 %v923, %v1042
  %v1044 = vpop.f32.mrb[0].mxu0
  %1045 = vmatprep.mubr.f32.mxu0 0.0
  %1046 = vmatmul.mubr.f32.gmra.mrb[0].mxu0 %v815
  %v1047 = vpop.f32.mrb[0].mxu0
  %v1048 = vadd.f32 %v928, %v1047
  %v1049 = vpop.f32.mrb[0].mxu0
  %1050 = vmatprep.mubr.f32.mxu0 0.0
  %1051 = vmatmul.mubr.f32.gmra.mrb[0].mxu0 %v817
  %v1052 = vpop.f32.mrb[0].mxu0
  %v1053 = vadd.f32 %v933, %v1052
  %v1054 = vpop.f32.mrb[0].mxu0
  %1055 = vmatprep.mubr.f32.mxu0 0.0
  %1056 = vmatmul.mubr.f32.gmra.mrb[0].mxu0 %v819
  %v1057 = vpop.f32.mrb[0].mxu0
  %v1058 = vadd.f32 %v938, %v1057
  %v1059 = vpop.f32.mrb[0].mxu0
  %1060 = vdwg.mxu0
  %v1061 = vmul.f32 %v1008, 0.01
  %v1062 = vmul.f32 %v1013, 0.01
  %v1063 = vmul.f32 %v1018, 0.01
  %v1064 = vmul.f32 %v1023, 0.01
  %v1065 = vmul.f32 %v1028, 0.01
  %v1066 = vmul.f32 %v1033, 0.01
  %v1067 = vmax.f32 %v1008, %v1061
  %v1068 = vmax.f32 %v1013, %v1062
  %v1069 = vmax.f32 %v1018, %v1063
  %v1070 = vmax.f32 %v1023, %v1064
  %v1071 = vmax.f32 %v1028, %v1065
  %v1072 = vmax.f32 %v1033, %v1066
  %v1073 = vmul.f32 %v1038, 0.01
  %v1074 = vmul.f32 %v1043, 0.01
  %v1075 = vmul.f32 %v1048, 0.01
  %v1076 = vmul.f32 %v1053, 0.01
  %v1077 = vmul.f32 %v1058, 0.01
  %v1078 = vmax.f32 %v1038, %v1073
  %v1079 = vmax.f32 %v1043, %v1074
  %v1080 = vmax.f32 %v1048, %v1075
  %v1081 = vmax.f32 %v1053, %v1076
  %v1082 = vmax.f32 %v1058, %v1077
  %v1089 = vrot.slane %v1072, 2
  %v1090 = vrot.slane %v1078, 2
  %v1091 = vsel %vm86, %v1089, %v1090
  %v1092 = vrot.slane %v1079, 2
  %v1093 = vsel %vm86, %v1090, %v1092
  %v1094 = vrot.slane %v1080, 2
  %v1095 = vsel %vm86, %v1092, %v1094
  %v1096 = vrot.slane %v1081, 2
  %v1097 = vsel %vm86, %v1094, %v1096
  %v1098 = vrot.slane %v1082, 2
  %v1099 = vsel %vm86, %v1096, %v1098
  %v1106 = vmax.f32 %v1067, %v1091
  %v1107 = vmax.f32 %v1068, %v1093
  %v1108 = vmax.f32 %v1069, %v1095
  %v1109 = vmax.f32 %v1070, %v1097
  %v1110 = vmax.f32 %v1071, %v1099
  %v1111 = vmax.f32 %v1072, %v1098
  %v1117 = vrot.slane %v1106, 2
  %v1118 = vrot.slane %v1107, 2
  %v1119 = vsel %vm86, %v1117, %v1118
  %v1120 = vrot.slane %v1108, 2
  %v1121 = vsel %vm86, %v1118, %v1120
  %v1122 = vrot.slane %v1109, 2
  %v1123 = vsel %vm86, %v1120, %v1122
  %v1124 = vrot.slane %v1110, 2
  %v1125 = vsel %vm86, %v1122, %v1124
  %1126 = vrot.lane.b32.xlu0 %v1119, 48
  %v1127 = vpop.permute.xlu0 %1126
  %1128 = vrot.lane.b32.xlu0 %v1121, 48
  %v1129 = vpop.permute.xlu0 %1128
  %1130 = vrot.lane.b32.xlu0 %v1123, 48
  %v1131 = vpop.permute.xlu0 %1130
  %1132 = vrot.lane.b32.xlu0 %v1125, 48
  %v1133 = vpop.permute.xlu0 %1132
  %1134 = vrot.lane.b32.xlu0 %v1124, 48
  %v1135 = vpop.permute.xlu0 %1134
  %v1141 = vrot.slane %v1106, 4
  %v1142 = vrot.slane %v1107, 4
  %v1143 = vsel %vm146, %v1141, %v1142
  %v1144 = vrot.slane %v1108, 4
  %v1145 = vsel %vm146, %v1142, %v1144
  %v1146 = vrot.slane %v1109, 4
  %v1147 = vsel %vm146, %v1144, %v1146
  %v1148 = vrot.slane %v1110, 4
  %v1149 = vsel %vm146, %v1146, %v1148
  %1150 = vrot.lane.b32.xlu0 %v1143, 96
  %v1151 = vpop.permute.xlu0 %1150
  %1152 = vrot.lane.b32.xlu0 %v1145, 96
  %v1153 = vpop.permute.xlu0 %1152
  %1154 = vrot.lane.b32.xlu0 %v1147, 96
  %v1155 = vpop.permute.xlu0 %1154
  %1156 = vrot.lane.b32.xlu0 %v1149, 96
  %v1157 = vpop.permute.xlu0 %1156
  %1158 = vrot.lane.b32.xlu0 %v1148, 96
  %v1159 = vpop.permute.xlu0 %1158
  %v1165 = vrot.slane %v1106, 6
  %v1166 = vrot.slane %v1107, 6
  %v1167 = vsel %vm513, %v1165, %v1166
  %v1168 = vrot.slane %v1108, 6
  %v1169 = vsel %vm513, %v1166, %v1168
  %v1170 = vrot.slane %v1109, 6
  %v1171 = vsel %vm513, %v1168, %v1170
  %v1172 = vrot.slane %v1110, 6
  %v1173 = vsel %vm513, %v1170, %v1172
  %1174 = vrot.lane.b32.xlu0 %v1167, 16
  %v1175 = vpop.permute.xlu0 %1174
  %1176 = vrot.lane.b32.xlu0 %v1169, 16
  %v1177 = vpop.permute.xlu0 %1176
  %1178 = vrot.lane.b32.xlu0 %v1171, 16
  %v1179 = vpop.permute.xlu0 %1178
  %1180 = vrot.lane.b32.xlu0 %v1173, 16
  %v1181 = vpop.permute.xlu0 %1180
  %1182 = vrot.lane.b32.xlu0 %v1172, 16
  %v1183 = vpop.permute.xlu0 %1182
  %1190 = vrot.lane.b32.xlu0 %v1107, 64
  %v1191 = vpop.permute.xlu0 %1190
  %1192 = vrot.lane.b32.xlu0 %v1108, 64
  %v1193 = vpop.permute.xlu0 %1192
  %1194 = vrot.lane.b32.xlu0 %v1109, 64
  %v1195 = vpop.permute.xlu0 %1194
  %1196 = vrot.lane.b32.xlu0 %v1110, 64
  %v1197 = vpop.permute.xlu0 %1196
  %1198 = vrot.lane.b32.xlu0 %v1111, 64
  %v1199 = vpop.permute.xlu0 %1198
  %vm1205 = vcmask 392192
  %v1206 = vsel %vm1205, %v1106, %v1127
  %v1207 = vsel %vm1205, %v1107, %v1129
  %v1208 = vsel %vm1205, %v1108, %v1131
  %v1209 = vsel %vm1205, %v1109, %v1133
  %v1210 = vsel %vm1205, %v1110, %v1135
  %v1211 = vsel %vm175, %v1206, %v1151
  %v1212 = vsel %vm175, %v1207, %v1153
  %v1213 = vsel %vm175, %v1208, %v1155
  %v1214 = vsel %vm175, %v1209, %v1157
  %v1215 = vsel %vm175, %v1210, %v1159
  %vm1216 = vcmask 130048
  %v1217 = vsel %vm1216, %v1151, %v1175
  %v1218 = vsel %vm1216, %v1153, %v1177
  %v1219 = vsel %vm1216, %v1155, %v1179
  %v1220 = vsel %vm1216, %v1157, %v1181
  %v1221 = vsel %vm1216, %v1159, %v1183
  %v1222 = vsel %vm168, %v1217, %v1191
  %v1223 = vsel %vm168, %v1218, %v1193
  %v1224 = vsel %vm168, %v1219, %v1195
  %v1225 = vsel %vm168, %v1220, %v1197
  %v1226 = vsel %vm168, %v1221, %v1199
  %v1227 = vld [vmem:[%s4] sm:$0xff]
  %v1228 = vld [vmem:[%s4 + $0x8] sm:$0xff]
  %v1229 = vld [vmem:[%s4 + $0x10] sm:$0xff]
  %v1230 = vld [vmem:[%s4 + $0x18] sm:$0xff]
  %v1231 = vld [vmem:[%s4 + $0x20] sm:$0xff]
  %v1232 = vld [vmem:[%s4 + $0x28] sm:$0xff]
  %v1233 = vld [vmem:[%s4 + $0x30] sm:$0xff]
  %v1234 = vld [vmem:[%s4 + $0x38] sm:$0xff]
  %v1235 = vld [vmem:[%s4 + $0x40] sm:$0xff]
  %v1236 = vld [vmem:[%s4 + $0x48] sm:$0xff]
  %v1237 = vld [vmem:[%s4 + $0x50] sm:$0xff]
  %v1238 = vld [vmem:[%s4 + $0x58] sm:$0xff]
  %v1239 = vld [vmem:[%s4 + $0x60] sm:$0xff]
  %v1240 = vld [vmem:[%s4 + $0x68] sm:$0xff]
  %v1241 = vld [vmem:[%s4 + $0x70] sm:$0xff]
  %v1242 = vld [vmem:[%s4 + $0x78] sm:$0xff]
  %v1243 = vld [vmem:[%s4 + $0x80] sm:$0xff]
  %v1244 = vld [vmem:[%s4 + $0x88] sm:$0xff]
  %v1245 = vld [vmem:[%s4 + $0x90] sm:$0xff]
  %v1246 = vld [vmem:[%s4 + $0x98] sm:$0xff]
  %v1247 = vld [vmem:[%s4 + $0xa0] sm:$0xff]
  %v1248 = vld [vmem:[%s4 + $0xa8] sm:$0xff]
  %v1249 = vld [vmem:[%s4 + $0xb0] sm:$0xff]
  %v1250 = vld [vmem:[%s4 + $0xb8] sm:$0xff]
  %v1251 = vld [vmem:[%s4 + $0xc0] sm:$0xff]
  %v1252 = vld [vmem:[%s4 + $0xc8] sm:$0xff]
  %v1253 = vld [vmem:[%s4 + $0xd0] sm:$0xff]
  %v1254 = vld [vmem:[%s4 + $0xd8] sm:$0xff]
  %v1255 = vld [vmem:[%s4 + $0xe0] sm:$0xff]
  %v1256 = vld [vmem:[%s4 + $0xe8] sm:$0xff]
  %v1257 = vld [vmem:[%s5] sm:$0x3]
  %v1259 = vlaneseq
  %v1260 = vshrl.u32 %v1259, 7
  %v1261 = vsub.s32 0, %v1260
  %v1262 = vrot.slane %v1257, %v1261
  %v1263 = vlaneseq
  %v1264 = vshrl.u32 %v1263, 7
  %v1265 = vsub.s32 1, %v1264
  %v1266 = vrot.slane %v1257, %v1265
  %1267 = vrot.lane.b32.xlu0 %v1262, 16
  %v1268 = vpop.permute.xlu0 %1267
  %1269 = vrot.lane.b32.xlu0 %v1266, 16
  %v1270 = vpop.permute.xlu0 %1269
  %v1271 = vsel %vm1216, %v1268, %v1270
  %vm1273 = vcmask 916480
  %v1275 = vsel %vm1273, %v1222, 0
  %v1278 = vsel %vm1273, %v1223, 0
  %v1281 = vsel %vm1273, %v1224, 0
  %v1284 = vsel %vm1273, %v1225, 0
  %v1287 = vsel %vm1273, %v1226, 0
  %1289 = vmatprep.subr.mxu0 0.0
  %1290 = vmatpush1.msra.mxu0 %v1227
  %1291 = vmatprep.subr.mxu0 0.0
  %1292 = vmatpush1.msra.mxu0 %v1228
  %1293 = vmatprep.subr.mxu0 0.0
  %1294 = vmatpush1.msra.mxu0 %v1229
  %1295 = vmatprep.subr.mxu0 0.0
  %1296 = vmatpush1.msra.mxu0 %v1230
  %1297 = vmatprep.subr.mxu0 0.0
  %1298 = vmatpush1.msra.mxu0 %v1231
  %1299 = vmatprep.subr.mxu0 0.0
  %1300 = vmatpush1.msra.mxu0 %v1232
  %1301 = vmatprep.subr.mxu0 0.0
  %1302 = vmatpush1.msra.mxu0 %v1233
  %1303 = vmatprep.subr.mxu0 0.0
  %1304 = vmatpush1.msra.mxu0 %v1234
  %1305 = vmatprep.subr.mxu0 0.0
  %1306 = vmatpush1.msra.mxu0 %v1235
  %1307 = vmatprep.subr.mxu0 0.0
  %1308 = vmatpush1.msra.mxu0 %v1236
  %1309 = vmatprep.subr.mxu0 0.0
  %1310 = vmatpush1.msra.mxu0 %v1237
  %1311 = vmatprep.subr.mxu0 0.0
  %1312 = vmatpush1.msra.mxu0 %v1238
  %1313 = vmatprep.subr.mxu0 0.0
  %1314 = vmatpush1.msra.mxu0 %v1239
  %1315 = vmatprep.subr.mxu0 0.0
  %1316 = vmatpush1.msra.mxu0 %v1240
  %1317 = vmatprep.subr.mxu0 0.0
  %1318 = vmatpush1.msra.mxu0 %v1241
  %1319 = vmatprep.subr.mxu0 0.0
  %1320 = vmatpush1.msra.mxu0 %v1242
  %1321 = vmatprep.subr.mxu0 0.0
  %1322 = vmatpush1.msra.mxu0 %v1243
  %1323 = vmatprep.subr.mxu0 0.0
  %1324 = vmatpush1.msra.mxu0 %v1244
  %1325 = vmatprep.subr.mxu0 0.0
  %1326 = vmatpush1.msra.mxu0 %v1245
  %1327 = vmatprep.subr.mxu0 0.0
  %1328 = vmatpush1.msra.mxu0 %v1246
  %1329 = vmatprep.subr.mxu0 0.0
  %1330 = vmatpush1.msra.mxu0 %v1247
  %1331 = vmatprep.subr.mxu0 0.0
  %1332 = vmatpush1.msra.mxu0 %v1248
  %1333 = vmatprep.subr.mxu0 0.0
  %1334 = vmatpush1.msra.mxu0 %v1249
  %1335 = vmatprep.subr.mxu0 0.0
  %1336 = vmatpush1.msra.mxu0 %v1250
  %1337 = vmatprep.subr.mxu0 0.0
  %1338 = vmatpush1.msra.mxu0 %v1251
  %1339 = vmatprep.subr.mxu0 0.0
  %1340 = vmatpush1.msra.mxu0 %v1252
  %1341 = vmatprep.subr.mxu0 0.0
  %1342 = vmatpush1.msra.mxu0 %v1253
  %1343 = vmatprep.subr.mxu0 0.0
  %1344 = vmatpush1.msra.mxu0 %v1254
  %1345 = vmatprep.subr.mxu0 0.0
  %1346 = vmatpush1.msra.mxu0 %v1255
  %1347 = vmatprep.subr.mxu0 0.0
  %1348 = vmatpush1.msra.mxu0 %v1256
  %1349 = vmatprep.subr.mxu0 0.0
  %1350 = vmatpush1.msra.mxu0 0.0
  %1351 = vmatprep.subr.mxu0 0.0
  %1352 = vmatpush1.msra.mxu0 0.0
  %1353 = vmatprep.mubr.f32.mxu0 %v1275
  %1354 = vmatmul.mubr.f32.gmra.mrb[0].mxu0 %v1211
  %v1355 = vpop.f32.mrb[0].mxu0
  %v1356 = vadd.f32 %v1271, %v1355
  %v1357 = vpop.f32.mrb[0].mxu0
  %1358 = vmatprep.mubr.f32.mxu0 %v1278
  %1359 = vmatmul.mubr.f32.gmra.mrb[0].mxu0 %v1212
  %v1360 = vpop.f32.mrb[0].mxu0
  %v1361 = vadd.f32 %v1271, %v1360
  %v1362 = vpop.f32.mrb[0].mxu0
  %1363 = vmatprep.mubr.f32.mxu0 %v1281
  %1364 = vmatmul.mubr.f32.gmra.mrb[0].mxu0 %v1213
  %v1365 = vpop.f32.mrb[0].mxu0
  %v1366 = vadd.f32 %v1271, %v1365
  %v1367 = vpop.f32.mrb[0].mxu0
  %1368 = vmatprep.mubr.f32.mxu0 %v1284
  %1369 = vmatmul.mubr.f32.gmra.mrb[0].mxu0 %v1214
  %v1370 = vpop.f32.mrb[0].mxu0
  %v1371 = vadd.f32 %v1271, %v1370
  %v1372 = vpop.f32.mrb[0].mxu0
  %1373 = vmatprep.mubr.f32.mxu0 %v1287
  %1374 = vmatmul.mubr.f32.gmra.mrb[0].mxu0 %v1215
  %v1375 = vpop.f32.mrb[0].mxu0
  %v1376 = vadd.f32 %v1271, %v1375
  %v1377 = vpop.f32.mrb[0].mxu0
  %1378 = vdwg.mxu0
  %v1380 = vrot.slane %v1356, 2
  %1381 = vrot.lane.b32.xlu0 %v1380, 20
  %v1382 = vpop.permute.xlu0 %1381
  %v1384 = vrot.slane %v1356, 4
  %1385 = vrot.lane.b32.xlu0 %v1384, 40
  %v1386 = vpop.permute.xlu0 %1385
  %v1388 = vrot.slane %v1356, 6
  %1389 = vrot.lane.b32.xlu0 %v1388, 60
  %v1390 = vpop.permute.xlu0 %1389
  %1393 = vrot.lane.b32.xlu0 %v1361, 80
  %v1394 = vpop.permute.xlu0 %1393
  %v1396 = vrot.slane %v1361, 2
  %1397 = vrot.lane.b32.xlu0 %v1396, 100
  %v1398 = vpop.permute.xlu0 %1397
  %v1400 = vrot.slane %v1361, 4
  %1401 = vrot.lane.b32.xlu0 %v1400, 120
  %v1402 = vpop.permute.xlu0 %1401
  %v1404 = vrot.slane %v1361, 6
  %1405 = vrot.lane.b32.xlu0 %v1404, 12
  %v1406 = vpop.permute.xlu0 %1405
  %1409 = vrot.lane.b32.xlu0 %v1366, 32
  %v1410 = vpop.permute.xlu0 %1409
  %v1412 = vrot.slane %v1366, 2
  %1413 = vrot.lane.b32.xlu0 %v1412, 52
  %v1414 = vpop.permute.xlu0 %1413
  %v1416 = vrot.slane %v1366, 4
  %1417 = vrot.lane.b32.xlu0 %v1416, 72
  %v1418 = vpop.permute.xlu0 %1417
  %v1420 = vrot.slane %v1366, 6
  %1421 = vrot.lane.b32.xlu0 %v1420, 92
  %v1422 = vpop.permute.xlu0 %1421
  %1425 = vrot.lane.b32.xlu0 %v1371, 112
  %v1426 = vpop.permute.xlu0 %1425
  %v1428 = vrot.slane %v1371, 2
  %1429 = vrot.lane.b32.xlu0 %v1428, 4
  %v1430 = vpop.permute.xlu0 %1429
  %v1432 = vrot.slane %v1371, 4
  %1433 = vrot.lane.b32.xlu0 %v1432, 24
  %v1434 = vpop.permute.xlu0 %1433
  %v1436 = vrot.slane %v1371, 6
  %1437 = vrot.lane.b32.xlu0 %v1436, 44
  %v1438 = vpop.permute.xlu0 %1437
  %vm1440 = vcmask 162816
  %v1441 = vsel %vm1440, %v1356, %v1382
  %vm1442 = vcmask 326656
  %v1443 = vsel %vm1442, %v1441, %v1386
  %vm1444 = vcmask 490496
  %v1445 = vsel %vm1444, %v1443, %v1390
  %vm1446 = vcmask 654336
  %v1447 = vsel %vm1446, %v1445, %v1394
  %vm1448 = vcmask 818176
  %v1449 = vsel %vm1448, %v1447, %v1398
  %vm1450 = vcmask 982016
  %v1451 = vsel %vm1450, %v1449, %v1402
  %vm1452 = vcmask 97280
  %v1453 = vsel %vm1452, %v1402, %v1406
  %v1454 = vsel %vm161, %v1453, %v1410
  %vm1455 = vcmask 424960
  %v1456 = vsel %vm1455, %v1454, %v1414
  %vm1457 = vcmask 588800
  %v1458 = vsel %vm1457, %v1456, %v1418
  %vm1459 = vcmask 752640
  %v1460 = vsel %vm1459, %v1458, %v1422
  %v1461 = vsel %vm1273, %v1460, %v1426
  %vm1462 = vcmask 31744
  %v1463 = vsel %vm1462, %v1426, %v1430
  %vm1464 = vcmask 195584
  %v1465 = vsel %vm1464, %v1463, %v1434
  %vm1466 = vcmask 359424
  %v1467 = vsel %vm1466, %v1465, %v1438
  %1469 = vrot.lane.b32.xlu0 %v1376, 64
  %v1470 = vpop.permute.xlu0 %1469
  %v1472 = vsel %vm168, %v1467, %v1470
  %v1473 = vsel %vm513, %v1451, 0.0
  %v1474 = vsel %vm513, %v1461, 0.0
  %v1475 = vadd.f32 %v1473, %v1474
  %vm1476 = vcmask 680960
  %v1477 = vsel %vm1476, %v1472, 0.0
  %v1478 = vadd.f32 %v1475, %v1477
  %1479 = vadd.xlane.f32.xlu0 %v1478
  %v1480 = vpop.xlane.xlu0 %1479
  %v1481 = vmul.f32 %v1480, 0.0029411765
  %v1482 = vsub.f32 %v1451, %v1481
  %v1483 = vsub.f32 %v1461, %v1481
  %v1484 = vsub.f32 %v1472, %v1481
  %v1485 = vmul.f32 %v1482, %v1482
  %v1486 = vmul.f32 %v1483, %v1483
  %v1487 = vmul.f32 %v1484, %v1484
  %v1488 = vsel %vm513, %v1485, 0.0
  %v1489 = vsel %vm513, %v1486, 0.0
  %v1490 = vadd.f32 %v1488, %v1489
  %v1491 = vsel %vm1476, %v1487, 0.0
  %v1492 = vadd.f32 %v1490, %v1491
  %1493 = vadd.xlane.f32.xlu0 %v1492
  %v1494 = vpop.xlane.xlu0 %1493
  %v1495 = vmul.f32 %v1494, 0.0029411765
  %v1496 = vadd.f32 %v1495, 1e-05
  %v1497 = vrsqrt.pop %v1496
  %v1498 = vmul.f32 %v1482, %v1497
  %v1499 = vmul.f32 %v1483, %v1497
  %v1500 = vmul.f32 %v1484, %v1497
  %v1501 = vld [vmem:[%s6] ss:$2 sm:$0x7]
  %v1503 = vlaneseq
  %v1504 = vshrl.u32 %v1503, 7
  %v1505 = vsub.s32 0, %v1504
  %v1506 = vrot.slane %v1501, %v1505
  %v1507 = vlaneseq
  %v1508 = vshrl.u32 %v1507, 7
  %v1509 = vsub.s32 1, %v1508
  %v1510 = vrot.slane %v1501, %v1509
  %v1511 = vlaneseq
  %v1512 = vshrl.u32 %v1511, 7
  %v1513 = vsub.s32 2, %v1512
  %v1514 = vrot.slane %v1501, %v1513
  %v1518 = vmul.f32 %v1498, %v1506
  %v1519 = vmul.f32 %v1499, %v1510
  %v1520 = vmul.f32 %v1500, %v1514
  %s1521 = scalar_lea.vmem %s6, 1
  %v1522 = vld [vmem:[%s1521] ss:$2 sm:$0x7]
  %v1524 = vlaneseq
  %v1525 = vshrl.u32 %v1524, 7
  %v1526 = vsub.s32 0, %v1525
  %v1527 = vrot.slane %v1522, %v1526
  %v1528 = vlaneseq
  %v1529 = vshrl.u32 %v1528, 7
  %v1530 = vsub.s32 1, %v1529
  %v1531 = vrot.slane %v1522, %v1530
  %v1532 = vlaneseq
  %v1533 = vshrl.u32 %v1532, 7
  %v1534 = vsub.s32 2, %v1533
  %v1535 = vrot.slane %v1522, %v1534
  %v1539 = vadd.f32 %v1518, %v1527
  %v1540 = vadd.f32 %v1519, %v1531
  %v1541 = vadd.f32 %v1520, %v1535
  %v1542 = vld [vmem:[%s7] sm:$0xff]
  %v1543 = vld [vmem:[%s7 + $0x8] sm:$0xff]
  %v1544 = vld [vmem:[%s7 + $0x10] sm:$0xff]
  %v1545 = vld [vmem:[%s7 + $0x18] sm:$0xff]
  %v1546 = vld [vmem:[%s7 + $0x20] sm:$0xff]
  %v1547 = vld [vmem:[%s7 + $0x28] sm:$0xff]
  %v1548 = vld [vmem:[%s7 + $0x30] sm:$0xff]
  %v1549 = vld [vmem:[%s7 + $0x38] sm:$0xff]
  %v1550 = vld [vmem:[%s7 + $0x40] sm:$0xff]
  %v1551 = vld [vmem:[%s7 + $0x48] sm:$0xff]
  %v1552 = vld [vmem:[%s7 + $0x50] sm:$0xff]
  %v1553 = vld [vmem:[%s7 + $0x58] sm:$0xff]
  %v1554 = vld [vmem:[%s7 + $0x60] sm:$0xff]
  %v1555 = vld [vmem:[%s7 + $0x68] sm:$0xff]
  %v1556 = vld [vmem:[%s7 + $0x70] sm:$0xff]
  %v1557 = vld [vmem:[%s7 + $0x78] sm:$0xff]
  %v1558 = vld [vmem:[%s7 + $0x80] sm:$0xff]
  %v1559 = vld [vmem:[%s7 + $0x88] sm:$0xff]
  %v1560 = vld [vmem:[%s7 + $0x90] sm:$0xff]
  %v1561 = vld [vmem:[%s7 + $0x98] sm:$0xff]
  %v1562 = vld [vmem:[%s7 + $0xa0] sm:$0xff]
  %v1563 = vld [vmem:[%s7 + $0xa8] sm:$0xff]
  %v1564 = vld [vmem:[%s7 + $0xb0] sm:$0xff]
  %v1565 = vld [vmem:[%s7 + $0xb8] sm:$0xff]
  %v1566 = vld [vmem:[%s7 + $0xc0] sm:$0xff]
  %v1567 = vld [vmem:[%s7 + $0xc8] sm:$0xff]
  %v1568 = vld [vmem:[%s7 + $0xd0] sm:$0xff]
  %v1569 = vld [vmem:[%s7 + $0xd8] sm:$0xff]
  %v1570 = vld [vmem:[%s7 + $0xe0] sm:$0xff]
  %v1571 = vld [vmem:[%s7 + $0xe8] sm:$0xff]
  %v1572 = vld [vmem:[%s7 + $0xf0] sm:$0xff]
  %v1573 = vld [vmem:[%s7 + $0xf8] sm:$0xff]
  %v1574 = vld [vmem:[%s7 + $0x100] sm:$0xff]
  %v1575 = vld [vmem:[%s7 + $0x108] sm:$0xff]
  %v1576 = vld [vmem:[%s7 + $0x110] sm:$0xff]
  %v1577 = vld [vmem:[%s7 + $0x118] sm:$0xff]
  %v1578 = vld [vmem:[%s7 + $0x120] sm:$0xff]
  %v1579 = vld [vmem:[%s7 + $0x128] sm:$0xff]
  %v1580 = vld [vmem:[%s7 + $0x130] sm:$0xff]
  %v1581 = vld [vmem:[%s7 + $0x138] sm:$0xff]
  %v1582 = vld [vmem:[%s7 + $0x140] sm:$0xff]
  %v1583 = vld [vmem:[%s7 + $0x148] sm:$0xff]
  %v1584 = vld [vmem:[%s7 + $0x150] sm:$0xf]
  %v1585 = vld [vmem:[%s11] sm:$0x1]
  %v1587 = vlaneseq
  %v1588 = vshrl.u32 %v1587, 7
  %v1589 = vsub.s32 0, %v1588
  %v1590 = vrot.slane %v1585, %v1589
  %vm1592 = vcmask 687104
  %v1594 = vsel %vm1592, %v1541, 0
  %v1597 = vsel %vm146, %v1584, 0
  %1599 = vmatprep.subr.mxu0 0.0
  %1600 = vmatpush1.msra.mxu0 %v1542
  %1601 = vmatprep.subr.mxu0 0.0
  %1602 = vmatpush1.msra.mxu0 %v1543
  %1603 = vmatprep.subr.mxu0 0.0
  %1604 = vmatpush1.msra.mxu0 %v1544
  %1605 = vmatprep.subr.mxu0 0.0
  %1606 = vmatpush1.msra.mxu0 %v1545
  %1607 = vmatprep.subr.mxu0 0.0
  %1608 = vmatpush1.msra.mxu0 %v1546
  %1609 = vmatprep.subr.mxu0 0.0
  %1610 = vmatpush1.msra.mxu0 %v1547
  %1611 = vmatprep.subr.mxu0 0.0
  %1612 = vmatpush1.msra.mxu0 %v1548
  %1613 = vmatprep.subr.mxu0 0.0
  %1614 = vmatpush1.msra.mxu0 %v1549
  %1615 = vmatprep.subr.mxu0 0.0
  %1616 = vmatpush1.msra.mxu0 %v1550
  %1617 = vmatprep.subr.mxu0 0.0
  %1618 = vmatpush1.msra.mxu0 %v1551
  %1619 = vmatprep.subr.mxu0 0.0
  %1620 = vmatpush1.msra.mxu0 %v1552
  %1621 = vmatprep.subr.mxu0 0.0
  %1622 = vmatpush1.msra.mxu0 %v1553
  %1623 = vmatprep.subr.mxu0 0.0
  %1624 = vmatpush1.msra.mxu0 %v1554
  %1625 = vmatprep.subr.mxu0 0.0
  %1626 = vmatpush1.msra.mxu0 %v1555
  %1627 = vmatprep.subr.mxu0 0.0
  %1628 = vmatpush1.msra.mxu0 %v1556
  %1629 = vmatprep.subr.mxu0 0.0
  %1630 = vmatpush1.msra.mxu0 %v1557
  %1631 = vmatprep.subr.mxu0 0.0
  %1632 = vmatpush1.msra.mxu0 %v1558
  %1633 = vmatprep.subr.mxu0 0.0
  %1634 = vmatpush1.msra.mxu0 %v1559
  %1635 = vmatprep.subr.mxu0 0.0
  %1636 = vmatpush1.msra.mxu0 %v1560
  %1637 = vmatprep.subr.mxu0 0.0
  %1638 = vmatpush1.msra.mxu0 %v1561
  %1639 = vmatprep.subr.mxu0 0.0
  %1640 = vmatpush1.msra.mxu0 %v1562
  %1641 = vmatprep.subr.mxu0 0.0
  %1642 = vmatpush1.msra.mxu0 %v1563
  %1643 = vmatprep.subr.mxu0 0.0
  %1644 = vmatpush1.msra.mxu0 %v1564
  %1645 = vmatprep.subr.mxu0 0.0
  %1646 = vmatpush1.msra.mxu0 %v1565
  %1647 = vmatprep.subr.mxu0 0.0
  %1648 = vmatpush1.msra.mxu0 %v1566
  %1649 = vmatprep.subr.mxu0 0.0
  %1650 = vmatpush1.msra.mxu0 %v1567
  %1651 = vmatprep.subr.mxu0 0.0
  %1652 = vmatpush1.msra.mxu0 %v1568
  %1653 = vmatprep.subr.mxu0 0.0
  %1654 = vmatpush1.msra.mxu0 %v1569
  %1655 = vmatprep.subr.mxu0 0.0
  %1656 = vmatpush1.msra.mxu0 %v1570
  %1657 = vmatprep.subr.mxu0 0.0
  %1658 = vmatpush1.msra.mxu0 %v1571
  %1659 = vmatprep.subr.mxu0 0.0
  %1660 = vmatpush1.msra.mxu0 %v1572
  %1661 = vmatprep.subr.mxu0 0.0
  %1662 = vmatpush1.msra.mxu0 %v1573
  %1663 = vmatprep.mubr.f32.mxu0 %v1540
  %1664 = vmatmul.mubr.f32.gmra.mrb[0].mxu0 %v1539
  %v1665 = vpop.f32.mrb[0].mxu0
  %v1666 = vadd.f32 %v1590, %v1665
  %v1667 = vpop.f32.mrb[0].mxu0
  %1668 = vdwg.mxu0
  %1669 = vmatprep.subr.mxu0 0.0
  %1670 = vmatpush1.msra.mxu0 %v1574
  %1671 = vmatprep.subr.mxu0 0.0
  %1672 = vmatpush1.msra.mxu0 %v1575
  %1673 = vmatprep.subr.mxu0 0.0
  %1674 = vmatpush1.msra.mxu0 %v1576
  %1675 = vmatprep.subr.mxu0 0.0
  %1676 = vmatpush1.msra.mxu0 %v1577
  %1677 = vmatprep.subr.mxu0 0.0
  %1678 = vmatpush1.msra.mxu0 %v1578
  %1679 = vmatprep.subr.mxu0 0.0
  %1680 = vmatpush1.msra.mxu0 %v1579
  %1681 = vmatprep.subr.mxu0 0.0
  %1682 = vmatpush1.msra.mxu0 %v1580
  %1683 = vmatprep.subr.mxu0 0.0
  %1684 = vmatpush1.msra.mxu0 %v1581
  %1685 = vmatprep.subr.mxu0 0.0
  %1686 = vmatpush1.msra.mxu0 %v1582
  %1687 = vmatprep.subr.mxu0 0.0
  %1688 = vmatpush1.msra.mxu0 %v1583
  %1689 = vmatprep.subr.mxu0 0.0
  %1690 = vmatpush1.msra.mxu0 %v1597
  %1691 = vmatprep.subr.mxu0 0.0
  %1692 = vmatpush1.msra.mxu0 0.0
  %1693 = vmatprep.subr.mxu0 0.0
  %1694 = vmatpush1.msra.mxu0 0.0
  %1695 = vmatprep.subr.mxu0 0.0
  %1696 = vmatpush1.msra.mxu0 0.0
  %1697 = vmatprep.subr.mxu0 0.0
  %1698 = vmatpush1.msra.mxu0 0.0
  %1699 = vmatprep.subr.mxu0 0.0
  %1700 = vmatpush1.msra.mxu0 0.0
  %1701 = vmatprep.subr.mxu0 0.0
  %1702 = vmatpush1.msra.mxu0 0.0
  %1703 = vmatprep.subr.mxu0 0.0
  %1704 = vmatpush1.msra.mxu0 0.0
  %1705 = vmatprep.subr.mxu0 0.0
  %1706 = vmatpush1.msra.mxu0 0.0
  %1707 = vmatprep.subr.mxu0 0.0
  %1708 = vmatpush1.msra.mxu0 0.0
  %1709 = vmatprep.subr.mxu0 0.0
  %1710 = vmatpush1.msra.mxu0 0.0
  %1711 = vmatprep.subr.mxu0 0.0
  %1712 = vmatpush1.msra.mxu0 0.0
  %1713 = vmatprep.subr.mxu0 0.0
  %1714 = vmatpush1.msra.mxu0 0.0
  %1715 = vmatprep.subr.mxu0 0.0
  %1716 = vmatpush1.msra.mxu0 0.0
  %1717 = vmatprep.subr.mxu0 0.0
  %1718 = vmatpush1.msra.mxu0 0.0
  %1719 = vmatprep.subr.mxu0 0.0
  %1720 = vmatpush1.msra.mxu0 0.0
  %1721 = vmatprep.subr.mxu0 0.0
  %1722 = vmatpush1.msra.mxu0 0.0
  %1723 = vmatprep.subr.mxu0 0.0
  %1724 = vmatpush1.msra.mxu0 0.0
  %1725 = vmatprep.subr.mxu0 0.0
  %1726 = vmatpush1.msra.mxu0 0.0
  %1727 = vmatprep.subr.mxu0 0.0
  %1728 = vmatpush1.msra.mxu0 0.0
  %1729 = vmatprep.subr.mxu0 0.0
  %1730 = vmatpush1.msra.mxu0 0.0
  %1731 = vmatprep.subr.mxu0 0.0
  %1732 = vmatpush1.msra.mxu0 0.0
  %1733 = vmatprep.mubr.f32.mxu0 0.0
  %1734 = vmatmul.mubr.f32.gmra.mrb[0].mxu0 %v1594
  %v1735 = vpop.f32.mrb[0].mxu0
  %v1736 = vadd.f32 %v1666, %v1735
  %v1737 = vpop.f32.mrb[0].mxu0
  %1738 = vdwg.mxu0
  %v1739 = vmax.f32 %v1736, 0.0
  %v1740 = vld [vmem:[%s8] sm:$0xff]
  %v1741 = vld [vmem:[%s8 + $0x8] sm:$0xff]
  %v1742 = vld [vmem:[%s8 + $0x10] sm:$0xff]
  %v1743 = vld [vmem:[%s8 + $0x18] sm:$0xff]
  %v1744 = vld [vmem:[%s8 + $0x20] sm:$0xff]
  %v1745 = vld [vmem:[%s8 + $0x28] sm:$0xff]
  %v1746 = vld [vmem:[%s8 + $0x30] sm:$0xff]
  %v1747 = vld [vmem:[%s8 + $0x38] sm:$0xff]
  %1748 = vrot.lane.b32.xlu0 %v1590, 64
  %v1749 = vpop.permute.xlu0 %1748
  %v1752 = vsel %vm168, %v1739, 0
  %1754 = vmatprep.subr.mxu0 0.0
  %1755 = vmatpush1.msra.mxu0 %v1740
  %1756 = vmatprep.subr.mxu0 0.0
  %1757 = vmatpush1.msra.mxu0 %v1741
  %1758 = vmatprep.subr.mxu0 0.0
  %1759 = vmatpush1.msra.mxu0 %v1742
  %1760 = vmatprep.subr.mxu0 0.0
  %1761 = vmatpush1.msra.mxu0 %v1743
  %1762 = vmatprep.subr.mxu0 0.0
  %1763 = vmatpush1.msra.mxu0 %v1744
  %1764 = vmatprep.subr.mxu0 0.0
  %1765 = vmatpush1.msra.mxu0 %v1745
  %1766 = vmatprep.subr.mxu0 0.0
  %1767 = vmatpush1.msra.mxu0 %v1746
  %1768 = vmatprep.subr.mxu0 0.0
  %1769 = vmatpush1.msra.mxu0 %v1747
  %1770 = vmatprep.subr.mxu0 0.0
  %1771 = vmatpush1.msra.mxu0 0.0
  %1772 = vmatprep.subr.mxu0 0.0
  %1773 = vmatpush1.msra.mxu0 0.0
  %1774 = vmatprep.subr.mxu0 0.0
  %1775 = vmatpush1.msra.mxu0 0.0
  %1776 = vmatprep.subr.mxu0 0.0
  %1777 = vmatpush1.msra.mxu0 0.0
  %1778 = vmatprep.subr.mxu0 0.0
  %1779 = vmatpush1.msra.mxu0 0.0
  %1780 = vmatprep.subr.mxu0 0.0
  %1781 = vmatpush1.msra.mxu0 0.0
  %1782 = vmatprep.subr.mxu0 0.0
  %1783 = vmatpush1.msra.mxu0 0.0
  %1784 = vmatprep.subr.mxu0 0.0
  %1785 = vmatpush1.msra.mxu0 0.0
  %1786 = vmatprep.subr.mxu0 0.0
  %1787 = vmatpush1.msra.mxu0 0.0
  %1788 = vmatprep.subr.mxu0 0.0
  %1789 = vmatpush1.msra.mxu0 0.0
  %1790 = vmatprep.subr.mxu0 0.0
  %1791 = vmatpush1.msra.mxu0 0.0
  %1792 = vmatprep.subr.mxu0 0.0
  %1793 = vmatpush1.msra.mxu0 0.0
  %1794 = vmatprep.subr.mxu0 0.0
  %1795 = vmatpush1.msra.mxu0 0.0
  %1796 = vmatprep.subr.mxu0 0.0
  %1797 = vmatpush1.msra.mxu0 0.0
  %1798 = vmatprep.subr.mxu0 0.0
  %1799 = vmatpush1.msra.mxu0 0.0
  %1800 = vmatprep.subr.mxu0 0.0
  %1801 = vmatpush1.msra.mxu0 0.0
  %1802 = vmatprep.subr.mxu0 0.0
  %1803 = vmatpush1.msra.mxu0 0.0
  %1804 = vmatprep.subr.mxu0 0.0
  %1805 = vmatpush1.msra.mxu0 0.0
  %1806 = vmatprep.subr.mxu0 0.0
  %1807 = vmatpush1.msra.mxu0 0.0
  %1808 = vmatprep.subr.mxu0 0.0
  %1809 = vmatpush1.msra.mxu0 0.0
  %1810 = vmatprep.subr.mxu0 0.0
  %1811 = vmatpush1.msra.mxu0 0.0
  %1812 = vmatprep.subr.mxu0 0.0
  %1813 = vmatpush1.msra.mxu0 0.0
  %1814 = vmatprep.subr.mxu0 0.0
  %1815 = vmatpush1.msra.mxu0 0.0
  %1816 = vmatprep.subr.mxu0 0.0
  %1817 = vmatpush1.msra.mxu0 0.0
  %1818 = vmatprep.mubr.f32.mxu0 0.0
  %1819 = vmatmul.mubr.f32.gmra.mrb[0].mxu0 %v1752
  %v1820 = vpop.f32.mrb[0].mxu0
  %v1821 = vadd.f32 %v1749, %v1820
  %v1822 = vpop.f32.mrb[0].mxu0
  %1823 = vdwg.mxu0
  %v1824 = vmul.f32 %v1821, 0.01
  %v1825 = vmax.f32 %v1821, %v1824
  %v1826 = vld [vmem:[%s1] sm:$0x3]
  %1828 = vrot.lane.b32.xlu0 %v1826, 32
  %v1829 = vpop.permute.xlu0 %1828
  %v1831 = vsel %vm161, %v1825, %v1829
  %v1832 = vld [vmem:[%s9] sm:$0xff]
  %v1833 = vld [vmem:[%s9 + $0x8] sm:$0xff]
  %v1834 = vld [vmem:[%s9 + $0x10] sm:$0xff]
  %v1835 = vld [vmem:[%s9 + $0x18] sm:$0xff]
  %v1836 = vld [vmem:[%s9 + $0x20] sm:$0xff]
  %1837 = vrot.lane.b32.xlu0 %v1590, 32
  %v1838 = vpop.permute.xlu0 %1837
  %v1841 = vsel %vm1442, %v1831, 0
  %1843 = vmatprep.subr.mxu0 0.0
  %1844 = vmatpush1.msra.mxu0 %v1832
  %1845 = vmatprep.subr.mxu0 0.0
  %1846 = vmatpush1.msra.mxu0 %v1833
  %1847 = vmatprep.subr.mxu0 0.0
  %1848 = vmatpush1.msra.mxu0 %v1834
  %1849 = vmatprep.subr.mxu0 0.0
  %1850 = vmatpush1.msra.mxu0 %v1835
  %1851 = vmatprep.subr.mxu0 0.0
  %1852 = vmatpush1.msra.mxu0 %v1836
  %1853 = vmatprep.subr.mxu0 0.0
  %1854 = vmatpush1.msra.mxu0 0.0
  %1855 = vmatprep.subr.mxu0 0.0
  %1856 = vmatpush1.msra.mxu0 0.0
  %1857 = vmatprep.subr.mxu0 0.0
  %1858 = vmatpush1.msra.mxu0 0.0
  %1859 = vmatprep.subr.mxu0 0.0
  %1860 = vmatpush1.msra.mxu0 0.0
  %1861 = vmatprep.subr.mxu0 0.0
  %1862 = vmatpush1.msra.mxu0 0.0
  %1863 = vmatprep.subr.mxu0 0.0
  %1864 = vmatpush1.msra.mxu0 0.0
  %1865 = vmatprep.subr.mxu0 0.0
  %1866 = vmatpush1.msra.mxu0 0.0
  %1867 = vmatprep.subr.mxu0 0.0
  %1868 = vmatpush1.msra.mxu0 0.0
  %1869 = vmatprep.subr.mxu0 0.0
  %1870 = vmatpush1.msra.mxu0 0.0
  %1871 = vmatprep.subr.mxu0 0.0
  %1872 = vmatpush1.msra.mxu0 0.0
  %1873 = vmatprep.subr.mxu0 0.0
  %1874 = vmatpush1.msra.mxu0 0.0
  %1875 = vmatprep.subr.mxu0 0.0
  %1876 = vmatpush1.msra.mxu0 0.0
  %1877 = vmatprep.subr.mxu0 0.0
  %1878 = vmatpush1.msra.mxu0 0.0
  %1879 = vmatprep.subr.mxu0 0.0
  %1880 = vmatpush1.msra.mxu0 0.0
  %1881 = vmatprep.subr.mxu0 0.0
  %1882 = vmatpush1.msra.mxu0 0.0
  %1883 = vmatprep.subr.mxu0 0.0
  %1884 = vmatpush1.msra.mxu0 0.0
  %1885 = vmatprep.subr.mxu0 0.0
  %1886 = vmatpush1.msra.mxu0 0.0
  %1887 = vmatprep.subr.mxu0 0.0
  %1888 = vmatpush1.msra.mxu0 0.0
  %1889 = vmatprep.subr.mxu0 0.0
  %1890 = vmatpush1.msra.mxu0 0.0
  %1891 = vmatprep.subr.mxu0 0.0
  %1892 = vmatpush1.msra.mxu0 0.0
  %1893 = vmatprep.subr.mxu0 0.0
  %1894 = vmatpush1.msra.mxu0 0.0
  %1895 = vmatprep.subr.mxu0 0.0
  %1896 = vmatpush1.msra.mxu0 0.0
  %1897 = vmatprep.subr.mxu0 0.0
  %1898 = vmatpush1.msra.mxu0 0.0
  %1899 = vmatprep.subr.mxu0 0.0
  %1900 = vmatpush1.msra.mxu0 0.0
  %1901 = vmatprep.subr.mxu0 0.0
  %1902 = vmatpush1.msra.mxu0 0.0
  %1903 = vmatprep.subr.mxu0 0.0
  %1904 = vmatpush1.msra.mxu0 0.0
  %1905 = vmatprep.subr.mxu0 0.0
  %1906 = vmatpush1.msra.mxu0 0.0
  %1907 = vmatprep.mubr.f32.mxu0 0.0
  %1908 = vmatmul.mubr.f32.gmra.mrb[0].mxu0 %v1841
  %v1909 = vpop.f32.mrb[0].mxu0
  %v1910 = vadd.f32 %v1838, %v1909
  %v1911 = vpop.f32.mrb[0].mxu0
  %1912 = vdwg.mxu0
  %v1913 = vmul.f32 %v1910, 0.01
  %v1914 = vmax.f32 %v1910, %v1913
  %1915 = vrot.lane.b32.xlu0 %v1826, 8
  %v1916 = vpop.permute.xlu0 %1915
  %v1918 = vsel %vm1216, %v1914, %v1916
  %v1919 = vld [vmem:[%s10] sm:$0xff]
  %v1920 = vld [vmem:[%s10 + $0x8] sm:$0xff]
  %v1921 = vld [vmem:[%s10 + $0x10] sm:$0xff]
  %v1922 = vld [vmem:[%s11] sm:$0x3]
  %v1924 = vlaneseq
  %v1925 = vshrl.u32 %v1924, 7
  %v1926 = vsub.s32 0, %v1925
  %v1927 = vrot.slane %v1922, %v1926
  %v1928 = vlaneseq
  %v1929 = vshrl.u32 %v1928, 7
  %v1930 = vsub.s32 1, %v1929
  %v1931 = vrot.slane %v1922, %v1930
  %1932 = vrot.lane.b32.xlu0 %v1927, 16
  %v1933 = vpop.permute.xlu0 %1932
  %1934 = vrot.lane.b32.xlu0 %v1931, 16
  %v1935 = vpop.permute.xlu0 %1934
  %v1936 = vsel %vm1216, %v1933, %v1935
  %v1939 = vsel %vm1464, %v1918, 0
  %1941 = vmatprep.subr.mxu0 0.0
  %1942 = vmatpush1.msra.mxu0 %v1919
  %1943 = vmatprep.subr.mxu0 0.0
  %1944 = vmatpush1.msra.mxu0 %v1920
  %1945 = vmatprep.subr.mxu0 0.0
  %1946 = vmatpush1.msra.mxu0 %v1921
  %1947 = vmatprep.subr.mxu0 0.0
  %1948 = vmatpush1.msra.mxu0 0.0
  %1949 = vmatprep.subr.mxu0 0.0
  %1950 = vmatpush1.msra.mxu0 0.0
  %1951 = vmatprep.subr.mxu0 0.0
  %1952 = vmatpush1.msra.mxu0 0.0
  %1953 = vmatprep.subr.mxu0 0.0
  %1954 = vmatpush1.msra.mxu0 0.0
  %1955 = vmatprep.subr.mxu0 0.0
  %1956 = vmatpush1.msra.mxu0 0.0
  %1957 = vmatprep.subr.mxu0 0.0
  %1958 = vmatpush1.msra.mxu0 0.0
  %1959 = vmatprep.subr.mxu0 0.0
  %1960 = vmatpush1.msra.mxu0 0.0
  %1961 = vmatprep.subr.mxu0 0.0
  %1962 = vmatpush1.msra.mxu0 0.0
  %1963 = vmatprep.subr.mxu0 0.0
  %1964 = vmatpush1.msra.mxu0 0.0
  %1965 = vmatprep.subr.mxu0 0.0
  %1966 = vmatpush1.msra.mxu0 0.0
  %1967 = vmatprep.subr.mxu0 0.0
  %1968 = vmatpush1.msra.mxu0 0.0
  %1969 = vmatprep.subr.mxu0 0.0
  %1970 = vmatpush1.msra.mxu0 0.0
  %1971 = vmatprep.subr.mxu0 0.0
  %1972 = vmatpush1.msra.mxu0 0.0
  %1973 = vmatprep.subr.mxu0 0.0
  %1974 = vmatpush1.msra.mxu0 0.0
  %1975 = vmatprep.subr.mxu0 0.0
  %1976 = vmatpush1.msra.mxu0 0.0
  %1977 = vmatprep.subr.mxu0 0.0
  %1978 = vmatpush1.msra.mxu0 0.0
  %1979 = vmatprep.subr.mxu0 0.0
  %1980 = vmatpush1.msra.mxu0 0.0
  %1981 = vmatprep.subr.mxu0 0.0
  %1982 = vmatpush1.msra.mxu0 0.0
  %1983 = vmatprep.subr.mxu0 0.0
  %1984 = vmatpush1.msra.mxu0 0.0
  %1985 = vmatprep.subr.mxu0 0.0
  %1986 = vmatpush1.msra.mxu0 0.0
  %1987 = vmatprep.subr.mxu0 0.0
  %1988 = vmatpush1.msra.mxu0 0.0
  %1989 = vmatprep.subr.mxu0 0.0
  %1990 = vmatpush1.msra.mxu0 0.0
  %1991 = vmatprep.subr.mxu0 0.0
  %1992 = vmatpush1.msra.mxu0 0.0
  %1993 = vmatprep.subr.mxu0 0.0
  %1994 = vmatpush1.msra.mxu0 0.0
  %1995 = vmatprep.subr.mxu0 0.0
  %1996 = vmatpush1.msra.mxu0 0.0
  %1997 = vmatprep.subr.mxu0 0.0
  %1998 = vmatpush1.msra.mxu0 0.0
  %1999 = vmatprep.subr.mxu0 0.0
  %2000 = vmatpush1.msra.mxu0 0.0
  %2001 = vmatprep.subr.mxu0 0.0
  %2002 = vmatpush1.msra.mxu0 0.0
  %2003 = vmatprep.subr.mxu0 0.0
  %2004 = vmatpush1.msra.mxu0 0.0
  %2005 = vmatprep.mubr.f32.mxu0 0.0
  %2006 = vmatmul.mubr.f32.gmra.mrb[0].mxu0 %v1939
  %v2007 = vpop.f32.mrb[0].mxu0
  %v2008 = vadd.f32 %v1936, %v2007
  %v2009 = vpop.f32.mrb[0].mxu0
  %2010 = vdwg.mxu0
  %2011 = vst [vmem:[%s12] sm:$0x3] %v2008
  // Predicated region
  $region50: #{critic_forward_pallas.1} parent=0 // pred_check
    _
  $region51: #{critic_forward_pallas.1} parent=0 // pred_check_branch
    %2013 = sbr.rel (0) target = $region53
  $region52: #{critic_forward_pallas.1} parent=0 // pred_region
    _
  $region53: #{critic_forward_pallas.1} parent=0 // pred_fallthru
    _
  // Predicated region
  $region54: #{critic_forward_pallas.1} parent=0 // pred_check
    _
  $region55: #{critic_forward_pallas.1} parent=0 // pred_check_branch
    %2015 = sbr.rel (0) target = $region57
  $region56: #{critic_forward_pallas.1} parent=0 // pred_region
    _
  $region57: #{critic_forward_pallas.1} parent=0 // pred_fallthru
    _

</llo_original>
